<compile_context>
chip_gen: v7x
topology: tpu7x:2x2x1
jax: 0.10.0
libtpu: 0.0.40
codegen_flags: <defaults>
</compile_context>

<pallas_src>
import functools

import jax
import jax.numpy as jnp
from jax.experimental import pallas as pl
from jax.experimental.pallas import tpu as pltpu


# --------------------- fused LSTM recurrence + BN/FC head -------------------
def fused_lstm_head_kernel(gx_ref, whh_ref, wfc_ref, bfc_ref, out_ref,
                           h_ref, c_ref):
    """gx_ref:  (t_chunk, B, 4Hp) bf16  precomputed x@W_ih^T + b (gate order i,f,g,o)
       whh_ref: (Hp, 4Hp)         f32   recurrent weights (padded)
       wfc_ref: (Hp, Cp)          f32   FC weights with eval-BatchNorm folded in
       bfc_ref: (1, Cp)           f32   FC bias with eval-BatchNorm folded in
       out_ref: (B, Cp)           f32   padded logits (valid in first C lanes)
       h_ref/c_ref: (B, Hp)       f32   persistent state carried across chunks
    """
    t_chunk = gx_ref.shape[0]
    Hp = whh_ref.shape[0]

    @pl.when(pl.program_id(0) == 0)
    def _():
        h_ref[...] = jnp.zeros_like(h_ref)
        c_ref[...] = jnp.zeros_like(c_ref)

    # Hoisted out of the recurrence: W_hh is loaded once per chunk and stays
    # value-resident (8 vregs worth of data) for every timestep in the chunk.
    whh = whh_ref[...]

    def step(t, carry):
        h, c = carry                                            # f32 (B, Hp)
        gates = gx_ref[t].astype(jnp.float32) + jnp.dot(
            h, whh, preferred_element_type=jnp.float32)         # (B, 4Hp) f32
        # Each gate block is one full 128-lane tile (padded offline): clean
        # vreg slices, no masked EUP/VPU ops on the serial chain.
        # PyTorch gate order: [i, f, g, o].
        i_g = jax.nn.sigmoid(gates[:, 0 * Hp:1 * Hp])
        f_g = jax.nn.sigmoid(gates[:, 1 * Hp:2 * Hp])
        g_g = jnp.tanh(gates[:, 2 * Hp:3 * Hp])
        o_g = jax.nn.sigmoid(gates[:, 3 * Hp:4 * Hp])
        c_new = f_g * c + i_g * g_g                             # f32 state math
        h_new = o_g * jnp.tanh(c_new)
        return h_new, c_new

    h, c = jax.lax.fori_loop(0, t_chunk, step, (h_ref[...], c_ref[...]),
                             unroll=min(t_chunk, 8))            # capped unroll
    h_ref[...] = h
    c_ref[...] = c

    # BatchNorm1d (eval) folded into wfc/bfc offline; Dropout(eval) = identity.
    @pl.when(pl.program_id(0) == pl.num_programs(0) - 1)
    def _():
        out_ref[...] = (jnp.dot(h, wfc_ref[...],
                                preferred_element_type=jnp.float32)
                        + bfc_ref[...]).astype(out_ref.dtype)


def run_fused_lstm_head(gates_x, w_hh_t, w_fc_fold, b_fc_fold, *, t_chunk=8):
    T, B, G4 = gates_x.shape
    Hp = w_hh_t.shape[0]
    Cp = w_fc_fold.shape[1]
    t_chunk = min(t_chunk, T)
    assert T % t_chunk == 0, "T must be a multiple of t_chunk"
    num_chunks = T // t_chunk

    grid_spec = pltpu.PrefetchScalarGridSpec(
        num_scalar_prefetch=0,
        grid=(num_chunks,),
        in_specs=[
            # Stream the gate slab in time chunks; weights stay resident
            # (same block index every grid step => no re-DMA).
            pl.BlockSpec((t_chunk, B, G4), lambda t: (t, 0, 0)),
            pl.BlockSpec((Hp, G4), lambda t: (0, 0)),
            pl.BlockSpec((Hp, Cp), lambda t: (0, 0)),
            pl.BlockSpec((1, Cp), lambda t: (0, 0)),
        ],
        out_specs=pl.BlockSpec((B, Cp), lambda t: (0, 0)),
        scratch_shapes=[pltpu.VMEM((B, Hp), jnp.float32),   # h carry
                        pltpu.VMEM((B, Hp), jnp.float32)],  # c carry
    )
    return pl.pallas_call(
        fused_lstm_head_kernel,
        out_shape=jax.ShapeDtypeStruct((B, Cp), jnp.float32),
        grid_spec=grid_spec,
        compiler_params=pltpu.CompilerParams(
            dimension_semantics=("arbitrary",)),   # time axis is a recurrence
    )(gates_x, w_hh_t, w_fc_fold, b_fc_fold)


# ------------------------------ full forward --------------------------------
def optimized_lstm_forward(tokens, params, num_classes):
    # Embedding gather (padding_idx row is zero) — plain JAX glue.
    x_emb = params["emb_table"][tokens]                         # (B, T, E) f32
    # Hoisted input projection: ONE GEMM over all T*B rows (f32 x f32 -> f32),
    # emitted directly as (T, B, 4Hp) and stored as bf16 to halve HBM traffic.
    gates_x = (jnp.einsum("bte,eg->tbg", x_emb, params["w_ih_t"],
                          preferred_element_type=jnp.float32)
               + params["b_lstm"]).astype(jnp.bfloat16)
    logits_padded = run_fused_lstm_head(gates_x, params["w_hh_t"],
                                        params["w_fc_fold"],
                                        params["b_fc_fold"])
    return logits_padded[:, :num_classes]


# ------------------------------ parameters ----------------------------------
def init_raw_params(key, num_classes, embedding_dim, hidden_dim):
    """Raw parameters in PyTorch layout (gate row order i, f, g, o)."""
    ks = jax.random.split(key, 8)
    E, H, C = embedding_dim, hidden_dim, num_classes
    scale = 1.0 / jnp.sqrt(jnp.float32(H))

    emb = jax.random.normal(ks[0], (C + 1, E), jnp.float32) * 0.1
    emb = emb.at[0].set(0.0)                                    # padding_idx=0

    w_ih = jax.random.uniform(ks[1], (4 * H, E), jnp.float32, -scale, scale)
    w_hh = jax.random.uniform(ks[2], (4 * H, H), jnp.float32, -scale, scale)
    b_ih = jax.random.uniform(ks[3], (4 * H,), jnp.float32, -scale, scale)
    b_hh = jax.random.uniform(ks[4], (4 * H,), jnp.float32, -scale, scale)

    w_fc = jax.random.uniform(ks[5], (C, H), jnp.float32, -scale, scale)
    b_fc = jax.random.uniform(ks[6], (C,), jnp.float32, -scale, scale)

    gamma = 1.0 + 0.1 * jax.random.normal(ks[7], (H,), jnp.float32)
    beta = jnp.zeros((H,), jnp.float32)
    mean = jnp.zeros((H,), jnp.float32)     # BatchNorm1d running stats (eval)
    var = jnp.ones((H,), jnp.float32)

    return dict(emb=emb, w_ih=w_ih, w_hh=w_hh, b_ih=b_ih, b_hh=b_hh,
                w_fc=w_fc, b_fc=b_fc, gamma=gamma, beta=beta, mean=mean, var=var)


def _round_up(x, m):
    return ((x + m - 1) // m) * m


def _pad_rows_per_gate(w, H, Hp):
    """(4H, ...) -> (4Hp, ...): each gate's H rows zero-padded to Hp rows."""
    pad = jnp.zeros((Hp - H,) + w.shape[1:], w.dtype)
    return jnp.concatenate(
        [jnp.concatenate([w[g * H:(g + 1) * H], pad], axis=0) for g in range(4)],
        axis=0)


def prepare_inference_params(raw, eps=1e-5):
    """Pad gate blocks to full 128-lane tiles, fold eval-BatchNorm into FC."""
    H = raw["w_hh"].shape[1]
    C = raw["w_fc"].shape[0]
    Hp = _round_up(H, 128)
    Cp = _round_up(C, 128)

    w_ih = _pad_rows_per_gate(raw["w_ih"], H, Hp)               # (4Hp, E)
    w_hh = _pad_rows_per_gate(raw["w_hh"], H, Hp)               # (4Hp, H)
    w_hh = jnp.pad(w_hh, ((0, 0), (0, Hp - H)))                 # (4Hp, Hp)
    b_lstm = _pad_rows_per_gate((raw["b_ih"] + raw["b_hh"])[:, None],
                                H, Hp)[:, 0]                    # (4Hp,)

    # bn(h) = h*s + t with s = gamma/sqrt(var+eps), t = beta - mean*s.
    # Fold in f32 (per review: keep folded weights in f32 for accuracy).
    s = raw["gamma"] * jax.lax.rsqrt(raw["var"] + eps)
    t = raw["beta"] - raw["mean"] * s
    w_fc_t = raw["w_fc"].T                                      # (H, C)
    w_fc_fold = w_fc_t * s[:, None]
    b_fc_fold = raw["b_fc"] + t @ w_fc_t
    w_fc_fold = jnp.pad(w_fc_fold, ((0, Hp - H), (0, Cp - C)))  # (Hp, Cp)
    b_fc_fold = jnp.pad(b_fc_fold, ((0, Cp - C),))              # (Cp,)

    return {
        "emb_table": raw["emb"],
        "w_ih_t": w_ih.T.astype(jnp.float32),                   # (E, 4Hp)
        "w_hh_t": w_hh.T.astype(jnp.float32),                   # (Hp, 4Hp)
        "b_lstm": b_lstm.reshape(1, -1).astype(jnp.float32),    # (1, 4Hp)
        "w_fc_fold": w_fc_fold.astype(jnp.float32),             # (Hp, Cp)
        "b_fc_fold": b_fc_fold.reshape(1, -1).astype(jnp.float32),  # (1, Cp)
    }


# --------------------- pure-JAX reference (PyTorch semantics) ----------------
def reference_forward(tokens, raw, eps=1e-5):
    x = raw["emb"][tokens]                                      # (B, T, E)
    B, T, _ = x.shape
    H = raw["w_hh"].shape[1]
    w_ih_t = raw["w_ih"].T
    w_hh_t = raw["w_hh"].T
    b = raw["b_ih"] + raw["b_hh"]
    h = jnp.zeros((B, H), jnp.float32)
    c = jnp.zeros((B, H), jnp.float32)
    for tt in range(T):
        g = x[:, tt] @ w_ih_t + h @ w_hh_t + b
        i = jax.nn.sigmoid(g[:, 0:H])
        f = jax.nn.sigmoid(g[:, H:2 * H])
        gg = jnp.tanh(g[:, 2 * H:3 * H])
        o = jax.nn.sigmoid(g[:, 3 * H:4 * H])
        c = f * c + i * gg
        h = o * jnp.tanh(c)
    s = raw["gamma"] / jnp.sqrt(raw["var"] + eps)
    hn = (h - raw["mean"]) * s + raw["beta"]                    # BatchNorm1d (eval)
    # Dropout(eval) = identity.
    return hn @ raw["w_fc"].T + raw["b_fc"]


if __name__ == "__main__":
    num_classes, E, H = 10, 64, 64
    B, T = 2, 8

    key = jax.random.PRNGKey(0)
    k_tok, k_par = jax.random.split(key)
    tokens = jax.random.randint(k_tok, (B, T), 0, num_classes + 1,
                                dtype=jnp.int32)

    raw = init_raw_params(k_par, num_classes, E, H)
    params = prepare_inference_params(raw)

    # TODO(synk): packed-sequence branch (seq_len sort + pack_padded_sequence)
    # is not implemented; this covers the seq_len=None path (h_n[-1]).
    fwd = jax.jit(functools.partial(optimized_lstm_forward,
                                    num_classes=num_classes))
    logits = fwd(tokens, params)
    jax.block_until_ready(logits)
    assert logits.shape == (B, num_classes)

    ref = reference_forward(tokens, raw)
    max_diff = float(jnp.max(jnp.abs(logits - ref)))
    assert jnp.allclose(logits, ref, atol=2e-2, rtol=2e-2), (
        "max abs diff %e" % max_diff)
    print("KERNEL_OK")
</pallas_src>

<mosaic_0001>
module attributes {stable_mosaic.version = 11 : i64} {
  func.func @fused_lstm_head_kernel(%arg0: i32, %arg1: memref<8x2x512xbf16, #tpu.memory_space<vmem>>, %arg2: memref<128x512xf32, #tpu.memory_space<vmem>>, %arg3: memref<128x128xf32, #tpu.memory_space<vmem>>, %arg4: memref<1x128xf32, #tpu.memory_space<vmem>>, %arg5: memref<2x128xf32, #tpu.memory_space<vmem>>, %arg6: memref<2x128xf32, #tpu.memory_space<vmem>>, %arg7: memref<2x128xf32, #tpu.memory_space<vmem>>) attributes {dimension_semantics = [#tpu.dimension_semantics<arbitrary>], iteration_bounds = array<i64: 1>, scalar_prefetch = 0 : i64, scratch_operands = 2 : i64, tpu.core_type = #tpu.core_type<tc>, window_params = [{transform_indices = @transform_0, window_bounds = array<i64: 8, 2, 512>}, {pipeline_mode = #tpu.pipeline_mode<synchronous>, transform_indices = @transform_1, window_bounds = array<i64: 128, 512>}, {pipeline_mode = #tpu.pipeline_mode<synchronous>, transform_indices = @transform_2, window_bounds = array<i64: 128, 128>}, {pipeline_mode = #tpu.pipeline_mode<synchronous>, transform_indices = @transform_3, window_bounds = array<i64: 1, 128>}, {pipeline_mode = #tpu.pipeline_mode<synchronous>, transform_indices = @transform_4, window_bounds = array<i64: 2, 128>}]} {
    %c0_i32 = arith.constant 0 : i32
    %0 = arith.cmpi eq, %arg0, %c0_i32 : i32
    %1 = arith.extui %0 : i1 to i32
    %c0_i32_0 = arith.constant 0 : i32
    %2 = arith.cmpi ne, %1, %c0_i32_0 : i32
    scf.if %2 {
      %cst_60 = arith.constant 0.000000e+00 : f32
      %259 = vector.broadcast %cst_60 : f32 to vector<2x128xf32>
      %c0_61 = arith.constant 0 : index
      %c0_62 = arith.constant 0 : index
      %260 = vector.load %arg6[%c0_61, %c0_62] : memref<2x128xf32, #tpu.memory_space<vmem>>, vector<2x128xf32>
      tpu.vector_store %arg6[%c0_61, %c0_62], %259 {strides = array<i32>} : memref<2x128xf32, #tpu.memory_space<vmem>>, vector<2x128xf32>,
      %cst_63 = arith.constant 0.000000e+00 : f32
      %261 = vector.broadcast %cst_63 : f32 to vector<2x128xf32>
      %c0_64 = arith.constant 0 : index
      %c0_65 = arith.constant 0 : index
      %262 = vector.load %arg7[%c0_64, %c0_65] : memref<2x128xf32, #tpu.memory_space<vmem>>, vector<2x128xf32>
      tpu.vector_store %arg7[%c0_64, %c0_65], %261 {strides = array<i32>} : memref<2x128xf32, #tpu.memory_space<vmem>>, vector<2x128xf32>,
    } else {
    }
    %c0 = arith.constant 0 : index
    %c0_1 = arith.constant 0 : index
    %3 = vector.load %arg2[%c0, %c0_1] : memref<128x512xf32, #tpu.memory_space<vmem>>, vector<128x512xf32>
    %c0_2 = arith.constant 0 : index
    %c0_3 = arith.constant 0 : index
    %4 = vector.load %arg6[%c0_2, %c0_3] : memref<2x128xf32, #tpu.memory_space<vmem>>, vector<2x128xf32>
    %c0_4 = arith.constant 0 : index
    %c0_5 = arith.constant 0 : index
    %5 = vector.load %arg7[%c0_4, %c0_5] : memref<2x128xf32, #tpu.memory_space<vmem>>, vector<2x128xf32>
    %c0_i32_6 = arith.constant 0 : i32
    %6 = arith.index_cast %c0_i32_6 : i32 to index
    %c0_7 = arith.constant 0 : index
    %c0_8 = arith.constant 0 : index
    %7 = vector.load %arg1[%6, %c0_7, %c0_8] : memref<8x2x512xbf16, #tpu.memory_space<vmem>>, vector<1x2x512xbf16>
    %8 = vector.shape_cast %7 : vector<1x2x512xbf16> to vector<2x512xbf16>
    %9 = arith.extf %8 : vector<2x512xbf16> to vector<2x512xf32>
    %cst = arith.constant dense<0.000000e+00> : vector<2x512xf32>
    %10 = tpu.matmul %4, %3, %cst {dimension_numbers = #tpu.dot_dimension_numbers<[1], [0], [0], [1], [0, 0, 1, 1], [], []>} : vector<2x128xf32>, vector<128x512xf32>, vector<2x512xf32> -> vector<2x512xf32>
    %11 = arith.addf %9, %10 : vector<2x512xf32>
    %12 = vector.extract_strided_slice %11 {offsets = [0, 0], sizes = [2, 128], strides = [1, 1]} : vector<2x512xf32> to vector<2x128xf32>
    %13 = arith.negf %12 : vector<2x128xf32>
    %14 = math.exp %13 : vector<2x128xf32>
    %cst_9 = arith.constant 1.000000e+00 : f32
    %15 = vector.broadcast %cst_9 : f32 to vector<2x128xf32>
    %16 = arith.addf %15, %14 : vector<2x128xf32>
    %17 = arith.divf %15, %16 : vector<2x128xf32>
    %18 = vector.extract_strided_slice %11 {offsets = [0, 128], sizes = [2, 128], strides = [1, 1]} : vector<2x512xf32> to vector<2x128xf32>
    %19 = arith.negf %18 : vector<2x128xf32>
    %20 = math.exp %19 : vector<2x128xf32>
    %cst_10 = arith.constant 1.000000e+00 : f32
    %21 = vector.broadcast %cst_10 : f32 to vector<2x128xf32>
    %22 = arith.addf %21, %20 : vector<2x128xf32>
    %23 = arith.divf %21, %22 : vector<2x128xf32>
    %24 = vector.extract_strided_slice %11 {offsets = [0, 256], sizes = [2, 128], strides = [1, 1]} : vector<2x512xf32> to vector<2x128xf32>
    %25 = math.tanh %24 : vector<2x128xf32>
    %26 = vector.extract_strided_slice %11 {offsets = [0, 384], sizes = [2, 128], strides = [1, 1]} : vector<2x512xf32> to vector<2x128xf32>
    %27 = arith.negf %26 : vector<2x128xf32>
    %28 = math.exp %27 : vector<2x128xf32>
    %cst_11 = arith.constant 1.000000e+00 : f32
    %29 = vector.broadcast %cst_11 : f32 to vector<2x128xf32>
    %30 = arith.addf %29, %28 : vector<2x128xf32>
    %31 = arith.divf %29, %30 : vector<2x128xf32>
    %32 = arith.mulf %23, %5 : vector<2x128xf32>
    %33 = arith.mulf %17, %25 : vector<2x128xf32>
    %34 = arith.addf %32, %33 : vector<2x128xf32>
    %35 = math.tanh %34 : vector<2x128xf32>
    %36 = arith.mulf %31, %35 : vector<2x128xf32>
    %c1_i32 = arith.constant 1 : i32
    %37 = arith.index_cast %c1_i32 : i32 to index
    %c0_12 = arith.constant 0 : index
    %c0_13 = arith.constant 0 : index
    %38 = vector.load %arg1[%37, %c0_12, %c0_13] : memref<8x2x512xbf16, #tpu.memory_space<vmem>>, vector<1x2x512xbf16>
    %39 = vector.shape_cast %38 : vector<1x2x512xbf16> to vector<2x512xbf16>
    %40 = arith.extf %39 : vector<2x512xbf16> to vector<2x512xf32>
    %cst_14 = arith.constant dense<0.000000e+00> : vector<2x512xf32>
    %41 = tpu.matmul %36, %3, %cst_14 {dimension_numbers = #tpu.dot_dimension_numbers<[1], [0], [0], [1], [0, 0, 1, 1], [], []>} : vector<2x128xf32>, vector<128x512xf32>, vector<2x512xf32> -> vector<2x512xf32>
    %42 = arith.addf %40, %41 : vector<2x512xf32>
    %43 = vector.extract_strided_slice %42 {offsets = [0, 0], sizes = [2, 128], strides = [1, 1]} : vector<2x512xf32> to vector<2x128xf32>
    %44 = arith.negf %43 : vector<2x128xf32>
    %45 = math.exp %44 : vector<2x128xf32>
    %cst_15 = arith.constant 1.000000e+00 : f32
    %46 = vector.broadcast %cst_15 : f32 to vector<2x128xf32>
    %47 = arith.addf %46, %45 : vector<2x128xf32>
    %48 = arith.divf %46, %47 : vector<2x128xf32>
    %49 = vector.extract_strided_slice %42 {offsets = [0, 128], sizes = [2, 128], strides = [1, 1]} : vector<2x512xf32> to vector<2x128xf32>
    %50 = arith.negf %49 : vector<2x128xf32>
    %51 = math.exp %50 : vector<2x128xf32>
    %cst_16 = arith.constant 1.000000e+00 : f32
    %52 = vector.broadcast %cst_16 : f32 to vector<2x128xf32>
    %53 = arith.addf %52, %51 : vector<2x128xf32>
    %54 = arith.divf %52, %53 : vector<2x128xf32>
    %55 = vector.extract_strided_slice %42 {offsets = [0, 256], sizes = [2, 128], strides = [1, 1]} : vector<2x512xf32> to vector<2x128xf32>
    %56 = math.tanh %55 : vector<2x128xf32>
    %57 = vector.extract_strided_slice %42 {offsets = [0, 384], sizes = [2, 128], strides = [1, 1]} : vector<2x512xf32> to vector<2x128xf32>
    %58 = arith.negf %57 : vector<2x128xf32>
    %59 = math.exp %58 : vector<2x128xf32>
    %cst_17 = arith.constant 1.000000e+00 : f32
    %60 = vector.broadcast %cst_17 : f32 to vector<2x128xf32>
    %61 = arith.addf %60, %59 : vector<2x128xf32>
    %62 = arith.divf %60, %61 : vector<2x128xf32>
    %63 = arith.mulf %54, %34 : vector<2x128xf32>
    %64 = arith.mulf %48, %56 : vector<2x128xf32>
    %65 = arith.addf %63, %64 : vector<2x128xf32>
    %66 = math.tanh %65 : vector<2x128xf32>
    %67 = arith.mulf %62, %66 : vector<2x128xf32>
    %c2_i32 = arith.constant 2 : i32
    %68 = arith.index_cast %c2_i32 : i32 to index
    %c0_18 = arith.constant 0 : index
    %c0_19 = arith.constant 0 : index
    %69 = vector.load %arg1[%68, %c0_18, %c0_19] : memref<8x2x512xbf16, #tpu.memory_space<vmem>>, vector<1x2x512xbf16>
    %70 = vector.shape_cast %69 : vector<1x2x512xbf16> to vector<2x512xbf16>
    %71 = arith.extf %70 : vector<2x512xbf16> to vector<2x512xf32>
    %cst_20 = arith.constant dense<0.000000e+00> : vector<2x512xf32>
    %72 = tpu.matmul %67, %3, %cst_20 {dimension_numbers = #tpu.dot_dimension_numbers<[1], [0], [0], [1], [0, 0, 1, 1], [], []>} : vector<2x128xf32>, vector<128x512xf32>, vector<2x512xf32> -> vector<2x512xf32>
    %73 = arith.addf %71, %72 : vector<2x512xf32>
    %74 = vector.extract_strided_slice %73 {offsets = [0, 0], sizes = [2, 128], strides = [1, 1]} : vector<2x512xf32> to vector<2x128xf32>
    %75 = arith.negf %74 : vector<2x128xf32>
    %76 = math.exp %75 : vector<2x128xf32>
    %cst_21 = arith.constant 1.000000e+00 : f32
    %77 = vector.broadcast %cst_21 : f32 to vector<2x128xf32>
    %78 = arith.addf %77, %76 : vector<2x128xf32>
    %79 = arith.divf %77, %78 : vector<2x128xf32>
    %80 = vector.extract_strided_slice %73 {offsets = [0, 128], sizes = [2, 128], strides = [1, 1]} : vector<2x512xf32> to vector<2x128xf32>
    %81 = arith.negf %80 : vector<2x128xf32>
    %82 = math.exp %81 : vector<2x128xf32>
    %cst_22 = arith.constant 1.000000e+00 : f32
    %83 = vector.broadcast %cst_22 : f32 to vector<2x128xf32>
    %84 = arith.addf %83, %82 : vector<2x128xf32>
    %85 = arith.divf %83, %84 : vector<2x128xf32>
    %86 = vector.extract_strided_slice %73 {offsets = [0, 256], sizes = [2, 128], strides = [1, 1]} : vector<2x512xf32> to vector<2x128xf32>
    %87 = math.tanh %86 : vector<2x128xf32>
    %88 = vector.extract_strided_slice %73 {offsets = [0, 384], sizes = [2, 128], strides = [1, 1]} : vector<2x512xf32> to vector<2x128xf32>
    %89 = arith.negf %88 : vector<2x128xf32>
    %90 = math.exp %89 : vector<2x128xf32>
    %cst_23 = arith.constant 1.000000e+00 : f32
    %91 = vector.broadcast %cst_23 : f32 to vector<2x128xf32>
    %92 = arith.addf %91, %90 : vector<2x128xf32>
    %93 = arith.divf %91, %92 : vector<2x128xf32>
    %94 = arith.mulf %85, %65 : vector<2x128xf32>
    %95 = arith.mulf %79, %87 : vector<2x128xf32>
    %96 = arith.addf %94, %95 : vector<2x128xf32>
    %97 = math.tanh %96 : vector<2x128xf32>
    %98 = arith.mulf %93, %97 : vector<2x128xf32>
    %c3_i32 = arith.constant 3 : i32
    %99 = arith.index_cast %c3_i32 : i32 to index
    %c0_24 = arith.constant 0 : index
    %c0_25 = arith.constant 0 : index
    %100 = vector.load %arg1[%99, %c0_24, %c0_25] : memref<8x2x512xbf16, #tpu.memory_space<vmem>>, vector<1x2x512xbf16>
    %101 = vector.shape_cast %100 : vector<1x2x512xbf16> to vector<2x512xbf16>
    %102 = arith.extf %101 : vector<2x512xbf16> to vector<2x512xf32>
    %cst_26 = arith.constant dense<0.000000e+00> : vector<2x512xf32>
    %103 = tpu.matmul %98, %3, %cst_26 {dimension_numbers = #tpu.dot_dimension_numbers<[1], [0], [0], [1], [0, 0, 1, 1], [], []>} : vector<2x128xf32>, vector<128x512xf32>, vector<2x512xf32> -> vector<2x512xf32>
    %104 = arith.addf %102, %103 : vector<2x512xf32>
    %105 = vector.extract_strided_slice %104 {offsets = [0, 0], sizes = [2, 128], strides = [1, 1]} : vector<2x512xf32> to vector<2x128xf32>
    %106 = arith.negf %105 : vector<2x128xf32>
    %107 = math.exp %106 : vector<2x128xf32>
    %cst_27 = arith.constant 1.000000e+00 : f32
    %108 = vector.broadcast %cst_27 : f32 to vector<2x128xf32>
    %109 = arith.addf %108, %107 : vector<2x128xf32>
    %110 = arith.divf %108, %109 : vector<2x128xf32>
    %111 = vector.extract_strided_slice %104 {offsets = [0, 128], sizes = [2, 128], strides = [1, 1]} : vector<2x512xf32> to vector<2x128xf32>
    %112 = arith.negf %111 : vector<2x128xf32>
    %113 = math.exp %112 : vector<2x128xf32>
    %cst_28 = arith.constant 1.000000e+00 : f32
    %114 = vector.broadcast %cst_28 : f32 to vector<2x128xf32>
    %115 = arith.addf %114, %113 : vector<2x128xf32>
    %116 = arith.divf %114, %115 : vector<2x128xf32>
    %117 = vector.extract_strided_slice %104 {offsets = [0, 256], sizes = [2, 128], strides = [1, 1]} : vector<2x512xf32> to vector<2x128xf32>
    %118 = math.tanh %117 : vector<2x128xf32>
    %119 = vector.extract_strided_slice %104 {offsets = [0, 384], sizes = [2, 128], strides = [1, 1]} : vector<2x512xf32> to vector<2x128xf32>
    %120 = arith.negf %119 : vector<2x128xf32>
    %121 = math.exp %120 : vector<2x128xf32>
    %cst_29 = arith.constant 1.000000e+00 : f32
    %122 = vector.broadcast %cst_29 : f32 to vector<2x128xf32>
    %123 = arith.addf %122, %121 : vector<2x128xf32>
    %124 = arith.divf %122, %123 : vector<2x128xf32>
    %125 = arith.mulf %116, %96 : vector<2x128xf32>
    %126 = arith.mulf %110, %118 : vector<2x128xf32>
    %127 = arith.addf %125, %126 : vector<2x128xf32>
    %128 = math.tanh %127 : vector<2x128xf32>
    %129 = arith.mulf %124, %128 : vector<2x128xf32>
    %c4_i32 = arith.constant 4 : i32
    %130 = arith.index_cast %c4_i32 : i32 to index
    %c0_30 = arith.constant 0 : index
    %c0_31 = arith.constant 0 : index
    %131 = vector.load %arg1[%130, %c0_30, %c0_31] : memref<8x2x512xbf16, #tpu.memory_space<vmem>>, vector<1x2x512xbf16>
    %132 = vector.shape_cast %131 : vector<1x2x512xbf16> to vector<2x512xbf16>
    %133 = arith.extf %132 : vector<2x512xbf16> to vector<2x512xf32>
    %cst_32 = arith.constant dense<0.000000e+00> : vector<2x512xf32>
    %134 = tpu.matmul %129, %3, %cst_32 {dimension_numbers = #tpu.dot_dimension_numbers<[1], [0], [0], [1], [0, 0, 1, 1], [], []>} : vector<2x128xf32>, vector<128x512xf32>, vector<2x512xf32> -> vector<2x512xf32>
    %135 = arith.addf %133, %134 : vector<2x512xf32>
    %136 = vector.extract_strided_slice %135 {offsets = [0, 0], sizes = [2, 128], strides = [1, 1]} : vector<2x512xf32> to vector<2x128xf32>
    %137 = arith.negf %136 : vector<2x128xf32>
    %138 = math.exp %137 : vector<2x128xf32>
    %cst_33 = arith.constant 1.000000e+00 : f32
    %139 = vector.broadcast %cst_33 : f32 to vector<2x128xf32>
    %140 = arith.addf %139, %138 : vector<2x128xf32>
    %141 = arith.divf %139, %140 : vector<2x128xf32>
    %142 = vector.extract_strided_slice %135 {offsets = [0, 128], sizes = [2, 128], strides = [1, 1]} : vector<2x512xf32> to vector<2x128xf32>
    %143 = arith.negf %142 : vector<2x128xf32>
    %144 = math.exp %143 : vector<2x128xf32>
    %cst_34 = arith.constant 1.000000e+00 : f32
    %145 = vector.broadcast %cst_34 : f32 to vector<2x128xf32>
    %146 = arith.addf %145, %144 : vector<2x128xf32>
    %147 = arith.divf %145, %146 : vector<2x128xf32>
    %148 = vector.extract_strided_slice %135 {offsets = [0, 256], sizes = [2, 128], strides = [1, 1]} : vector<2x512xf32> to vector<2x128xf32>
    %149 = math.tanh %148 : vector<2x128xf32>
    %150 = vector.extract_strided_slice %135 {offsets = [0, 384], sizes = [2, 128], strides = [1, 1]} : vector<2x512xf32> to vector<2x128xf32>
    %151 = arith.negf %150 : vector<2x128xf32>
    %152 = math.exp %151 : vector<2x128xf32>
    %cst_35 = arith.constant 1.000000e+00 : f32
    %153 = vector.broadcast %cst_35 : f32 to vector<2x128xf32>
    %154 = arith.addf %153, %152 : vector<2x128xf32>
    %155 = arith.divf %153, %154 : vector<2x128xf32>
    %156 = arith.mulf %147, %127 : vector<2x128xf32>
    %157 = arith.mulf %141, %149 : vector<2x128xf32>
    %158 = arith.addf %156, %157 : vector<2x128xf32>
    %159 = math.tanh %158 : vector<2x128xf32>
    %160 = arith.mulf %155, %159 : vector<2x128xf32>
    %c5_i32 = arith.constant 5 : i32
    %161 = arith.index_cast %c5_i32 : i32 to index
    %c0_36 = arith.constant 0 : index
    %c0_37 = arith.constant 0 : index
    %162 = vector.load %arg1[%161, %c0_36, %c0_37] : memref<8x2x512xbf16, #tpu.memory_space<vmem>>, vector<1x2x512xbf16>
    %163 = vector.shape_cast %162 : vector<1x2x512xbf16> to vector<2x512xbf16>
    %164 = arith.extf %163 : vector<2x512xbf16> to vector<2x512xf32>
    %cst_38 = arith.constant dense<0.000000e+00> : vector<2x512xf32>
    %165 = tpu.matmul %160, %3, %cst_38 {dimension_numbers = #tpu.dot_dimension_numbers<[1], [0], [0], [1], [0, 0, 1, 1], [], []>} : vector<2x128xf32>, vector<128x512xf32>, vector<2x512xf32> -> vector<2x512xf32>
    %166 = arith.addf %164, %165 : vector<2x512xf32>
    %167 = vector.extract_strided_slice %166 {offsets = [0, 0], sizes = [2, 128], strides = [1, 1]} : vector<2x512xf32> to vector<2x128xf32>
    %168 = arith.negf %167 : vector<2x128xf32>
    %169 = math.exp %168 : vector<2x128xf32>
    %cst_39 = arith.constant 1.000000e+00 : f32
    %170 = vector.broadcast %cst_39 : f32 to vector<2x128xf32>
    %171 = arith.addf %170, %169 : vector<2x128xf32>
    %172 = arith.divf %170, %171 : vector<2x128xf32>
    %173 = vector.extract_strided_slice %166 {offsets = [0, 128], sizes = [2, 128], strides = [1, 1]} : vector<2x512xf32> to vector<2x128xf32>
    %174 = arith.negf %173 : vector<2x128xf32>
    %175 = math.exp %174 : vector<2x128xf32>
    %cst_40 = arith.constant 1.000000e+00 : f32
    %176 = vector.broadcast %cst_40 : f32 to vector<2x128xf32>
    %177 = arith.addf %176, %175 : vector<2x128xf32>
    %178 = arith.divf %176, %177 : vector<2x128xf32>
    %179 = vector.extract_strided_slice %166 {offsets = [0, 256], sizes = [2, 128], strides = [1, 1]} : vector<2x512xf32> to vector<2x128xf32>
    %180 = math.tanh %179 : vector<2x128xf32>
    %181 = vector.extract_strided_slice %166 {offsets = [0, 384], sizes = [2, 128], strides = [1, 1]} : vector<2x512xf32> to vector<2x128xf32>
    %182 = arith.negf %181 : vector<2x128xf32>
    %183 = math.exp %182 : vector<2x128xf32>
    %cst_41 = arith.constant 1.000000e+00 : f32
    %184 = vector.broadcast %cst_41 : f32 to vector<2x128xf32>
    %185 = arith.addf %184, %183 : vector<2x128xf32>
    %186 = arith.divf %184, %185 : vector<2x128xf32>
    %187 = arith.mulf %178, %158 : vector<2x128xf32>
    %188 = arith.mulf %172, %180 : vector<2x128xf32>
    %189 = arith.addf %187, %188 : vector<2x128xf32>
    %190 = math.tanh %189 : vector<2x128xf32>
    %191 = arith.mulf %186, %190 : vector<2x128xf32>
    %c6_i32 = arith.constant 6 : i32
    %192 = arith.index_cast %c6_i32 : i32 to index
    %c0_42 = arith.constant 0 : index
    %c0_43 = arith.constant 0 : index
    %193 = vector.load %arg1[%192, %c0_42, %c0_43] : memref<8x2x512xbf16, #tpu.memory_space<vmem>>, vector<1x2x512xbf16>
    %194 = vector.shape_cast %193 : vector<1x2x512xbf16> to vector<2x512xbf16>
    %195 = arith.extf %194 : vector<2x512xbf16> to vector<2x512xf32>
    %cst_44 = arith.constant dense<0.000000e+00> : vector<2x512xf32>
    %196 = tpu.matmul %191, %3, %cst_44 {dimension_numbers = #tpu.dot_dimension_numbers<[1], [0], [0], [1], [0, 0, 1, 1], [], []>} : vector<2x128xf32>, vector<128x512xf32>, vector<2x512xf32> -> vector<2x512xf32>
    %197 = arith.addf %195, %196 : vector<2x512xf32>
    %198 = vector.extract_strided_slice %197 {offsets = [0, 0], sizes = [2, 128], strides = [1, 1]} : vector<2x512xf32> to vector<2x128xf32>
    %199 = arith.negf %198 : vector<2x128xf32>
    %200 = math.exp %199 : vector<2x128xf32>
    %cst_45 = arith.constant 1.000000e+00 : f32
    %201 = vector.broadcast %cst_45 : f32 to vector<2x128xf32>
    %202 = arith.addf %201, %200 : vector<2x128xf32>
    %203 = arith.divf %201, %202 : vector<2x128xf32>
    %204 = vector.extract_strided_slice %197 {offsets = [0, 128], sizes = [2, 128], strides = [1, 1]} : vector<2x512xf32> to vector<2x128xf32>
    %205 = arith.negf %204 : vector<2x128xf32>
    %206 = math.exp %205 : vector<2x128xf32>
    %cst_46 = arith.constant 1.000000e+00 : f32
    %207 = vector.broadcast %cst_46 : f32 to vector<2x128xf32>
    %208 = arith.addf %207, %206 : vector<2x128xf32>
    %209 = arith.divf %207, %208 : vector<2x128xf32>
    %210 = vector.extract_strided_slice %197 {offsets = [0, 256], sizes = [2, 128], strides = [1, 1]} : vector<2x512xf32> to vector<2x128xf32>
    %211 = math.tanh %210 : vector<2x128xf32>
    %212 = vector.extract_strided_slice %197 {offsets = [0, 384], sizes = [2, 128], strides = [1, 1]} : vector<2x512xf32> to vector<2x128xf32>
    %213 = arith.negf %212 : vector<2x128xf32>
    %214 = math.exp %213 : vector<2x128xf32>
    %cst_47 = arith.constant 1.000000e+00 : f32
    %215 = vector.broadcast %cst_47 : f32 to vector<2x128xf32>
    %216 = arith.addf %215, %214 : vector<2x128xf32>
    %217 = arith.divf %215, %216 : vector<2x128xf32>
    %218 = arith.mulf %209, %189 : vector<2x128xf32>
    %219 = arith.mulf %203, %211 : vector<2x128xf32>
    %220 = arith.addf %218, %219 : vector<2x128xf32>
    %221 = math.tanh %220 : vector<2x128xf32>
    %222 = arith.mulf %217, %221 : vector<2x128xf32>
    %c7_i32 = arith.constant 7 : i32
    %223 = arith.index_cast %c7_i32 : i32 to index
    %c0_48 = arith.constant 0 : index
    %c0_49 = arith.constant 0 : index
    %224 = vector.load %arg1[%223, %c0_48, %c0_49] : memref<8x2x512xbf16, #tpu.memory_space<vmem>>, vector<1x2x512xbf16>
    %225 = vector.shape_cast %224 : vector<1x2x512xbf16> to vector<2x512xbf16>
    %226 = arith.extf %225 : vector<2x512xbf16> to vector<2x512xf32>
    %cst_50 = arith.constant dense<0.000000e+00> : vector<2x512xf32>
    %227 = tpu.matmul %222, %3, %cst_50 {dimension_numbers = #tpu.dot_dimension_numbers<[1], [0], [0], [1], [0, 0, 1, 1], [], []>} : vector<2x128xf32>, vector<128x512xf32>, vector<2x512xf32> -> vector<2x512xf32>
    %228 = arith.addf %226, %227 : vector<2x512xf32>
    %229 = vector.extract_strided_slice %228 {offsets = [0, 0], sizes = [2, 128], strides = [1, 1]} : vector<2x512xf32> to vector<2x128xf32>
    %230 = arith.negf %229 : vector<2x128xf32>
    %231 = math.exp %230 : vector<2x128xf32>
    %cst_51 = arith.constant 1.000000e+00 : f32
    %232 = vector.broadcast %cst_51 : f32 to vector<2x128xf32>
    %233 = arith.addf %232, %231 : vector<2x128xf32>
    %234 = arith.divf %232, %233 : vector<2x128xf32>
    %235 = vector.extract_strided_slice %228 {offsets = [0, 128], sizes = [2, 128], strides = [1, 1]} : vector<2x512xf32> to vector<2x128xf32>
    %236 = arith.negf %235 : vector<2x128xf32>
    %237 = math.exp %236 : vector<2x128xf32>
    %cst_52 = arith.constant 1.000000e+00 : f32
    %238 = vector.broadcast %cst_52 : f32 to vector<2x128xf32>
    %239 = arith.addf %238, %237 : vector<2x128xf32>
    %240 = arith.divf %238, %239 : vector<2x128xf32>
    %241 = vector.extract_strided_slice %228 {offsets = [0, 256], sizes = [2, 128], strides = [1, 1]} : vector<2x512xf32> to vector<2x128xf32>
    %242 = math.tanh %241 : vector<2x128xf32>
    %243 = vector.extract_strided_slice %228 {offsets = [0, 384], sizes = [2, 128], strides = [1, 1]} : vector<2x512xf32> to vector<2x128xf32>
    %244 = arith.negf %243 : vector<2x128xf32>
    %245 = math.exp %244 : vector<2x128xf32>
    %cst_53 = arith.constant 1.000000e+00 : f32
    %246 = vector.broadcast %cst_53 : f32 to vector<2x128xf32>
    %247 = arith.addf %246, %245 : vector<2x128xf32>
    %248 = arith.divf %246, %247 : vector<2x128xf32>
    %249 = arith.mulf %240, %220 : vector<2x128xf32>
    %250 = arith.mulf %234, %242 : vector<2x128xf32>
    %251 = arith.addf %249, %250 : vector<2x128xf32>
    %252 = math.tanh %251 : vector<2x128xf32>
    %253 = arith.mulf %248, %252 : vector<2x128xf32>
    %c8_i32 = arith.constant 8 : i32
    %c0_54 = arith.constant 0 : index
    %c0_55 = arith.constant 0 : index
    %254 = vector.load %arg6[%c0_54, %c0_55] : memref<2x128xf32, #tpu.memory_space<vmem>>, vector<2x128xf32>
    tpu.vector_store %arg6[%c0_54, %c0_55], %253 {strides = array<i32>} : memref<2x128xf32, #tpu.memory_space<vmem>>, vector<2x128xf32>,
    %c0_56 = arith.constant 0 : index
    %c0_57 = arith.constant 0 : index
    %255 = vector.load %arg7[%c0_56, %c0_57] : memref<2x128xf32, #tpu.memory_space<vmem>>, vector<2x128xf32>
    tpu.vector_store %arg7[%c0_56, %c0_57], %251 {strides = array<i32>} : memref<2x128xf32, #tpu.memory_space<vmem>>, vector<2x128xf32>,
    %c0_i32_58 = arith.constant 0 : i32
    %256 = arith.cmpi eq, %arg0, %c0_i32_58 : i32
    %257 = arith.extui %256 : i1 to i32
    %c0_i32_59 = arith.constant 0 : i32
    %258 = arith.cmpi ne, %257, %c0_i32_59 : i32
    scf.if %258 {
      %c0_60 = arith.constant 0 : index
      %c0_61 = arith.constant 0 : index
      %259 = vector.load %arg3[%c0_60, %c0_61] : memref<128x128xf32, #tpu.memory_space<vmem>>, vector<128x128xf32>
      %cst_62 = arith.constant dense<0.000000e+00> : vector<2x128xf32>
      %260 = tpu.matmul %253, %259, %cst_62 {dimension_numbers = #tpu.dot_dimension_numbers<[1], [0], [0], [1], [0, 0, 1, 1], [], []>} : vector<2x128xf32>, vector<128x128xf32>, vector<2x128xf32> -> vector<2x128xf32>
      %c0_63 = arith.constant 0 : index
      %c0_64 = arith.constant 0 : index
      %261 = vector.load %arg4[%c0_63, %c0_64] : memref<1x128xf32, #tpu.memory_space<vmem>>, vector<1x128xf32>
      %262 = vector.broadcast %261 : vector<1x128xf32> to vector<2x128xf32>
      %263 = arith.addf %260, %262 : vector<2x128xf32>
      %c0_65 = arith.constant 0 : index
      %c0_66 = arith.constant 0 : index
      %264 = vector.load %arg5[%c0_65, %c0_66] : memref<2x128xf32, #tpu.memory_space<vmem>>, vector<2x128xf32>
      tpu.vector_store %arg5[%c0_65, %c0_66], %263 {strides = array<i32>} : memref<2x128xf32, #tpu.memory_space<vmem>>, vector<2x128xf32>,
    } else {
    }
    return
  }
  func.func @transform_0(%arg0: i32) -> (i32, i32, i32) {
    %c0_i32 = arith.constant 0 : i32
    %c0_i32_0 = arith.constant 0 : i32
    %c0_i32_1 = arith.constant 0 : i32
    return %arg0, %c0_i32, %c0_i32_0 : i32, i32, i32
  }
  func.func @transform_1(%arg0: i32) -> (i32, i32) {
    %c0_i32 = arith.constant 0 : i32
    %c0_i32_0 = arith.constant 0 : i32
    %c0_i32_1 = arith.constant 0 : i32
    return %c0_i32, %c0_i32_0 : i32, i32
  }
  func.func @transform_2(%arg0: i32) -> (i32, i32) {
    %c0_i32 = arith.constant 0 : i32
    %c0_i32_0 = arith.constant 0 : i32
    %c0_i32_1 = arith.constant 0 : i32
    return %c0_i32, %c0_i32_0 : i32, i32
  }
  func.func @transform_3(%arg0: i32) -> (i32, i32) {
    %c0_i32 = arith.constant 0 : i32
    %c0_i32_0 = arith.constant 0 : i32
    %c0_i32_1 = arith.constant 0 : i32
    return %c0_i32, %c0_i32_0 : i32, i32
  }
  func.func @transform_4(%arg0: i32) -> (i32, i32) {
    %c0_i32 = arith.constant 0 : i32
    %c0_i32_0 = arith.constant 0 : i32
    %c0_i32_1 = arith.constant 0 : i32
    return %c0_i32, %c0_i32_0 : i32, i32
  }
}

</mosaic_0001>

<llo_original>
// kernel: optimized_lstm_forward.1
$region0: #{optimized_lstm_forward.1}
  #allocation0 [shape = 'u32[]', space=smem, size = 0x4, offset = 0x4, fixed_abs, tag = 'smem constant byte address 0x4 - core index']
  #allocation1 [shape = 'u32[144,128]{1,0:T(1,128)}', space=vmem, size = 0x12000, scoped, tag = 'internal scratch']
  #allocation2 [shape = 'f32[2,128]{1,0:T(2,128)}', space=vmem, size = 0x400, scoped, tag = 'scratch operand']
  #allocation3 [shape = 'f32[2,128]{1,0:T(2,128)}', space=vmem, size = 0x400, scoped, tag = 'scratch operand']
  %s0 = inlined_call_operand.vmem [shape: bf16[8,2,512], index: 0, kind: input, shape index: {}]
  %s1 = inlined_call_operand.vmem [shape: f32[128,512], index: 1, kind: input, shape index: {}]
  %s2 = inlined_call_operand.hbm [shape: f32[128,128], index: 2, kind: input, shape index: {}]
  %s3 = inlined_call_operand.vmem [shape: f32[1,128], index: 3, kind: input, shape index: {}]
  %s4 = inlined_call_operand.hbm [shape: f32[2,128], index: 4, kind: output, shape index: {}]
  %s5 = sld [smem:[#allocation0]]
  $region38: #{optimized_lstm_forward.1} parent=0
    _
  %s7 = ssub.s32 1, %s5
  %s8 = scalar_select 0, %s7, %s5
  $region1: #{optimized_lstm_forward.1} parent=0
    #allocation4 [shape = 'u8[65536]{0}', space=vmem, size = 0x10000, scoped, tag = 'input window, operand 2, single buffered']
    #allocation5 [shape = 's32[1]{0}', space=sflag, size = 0x4, scoped, tag = 'scoped memory for optimized_lstm_forward.1']
    #allocation6 [shape = 's32[1]{0}', space=sflag, size = 0x4, scoped, tag = 'scoped memory for optimized_lstm_forward.1']
    #allocation7 [shape = 'u8[1024]{0}', space=vmem, size = 0x400, scoped, tag = 'output window, operand 0, single buffered']
    %9 = vsyncpa [#allocation5], 0
    %10 = vsyncpa [#allocation6], 0
    // Predicated region
    $region2: #{optimized_lstm_forward.1} parent=1 // pred_check
      _
    $region3: #{optimized_lstm_forward.1} parent=1 // pred_check_branch
      %12 = sbr.rel (0) target = $region5
    $region4: #{optimized_lstm_forward.1} parent=1 // pred_region
      _
    $region5: #{optimized_lstm_forward.1} parent=1 // pred_fallthru
      _
    // Predicated region
    $region6: #{optimized_lstm_forward.1} parent=1 // pred_check
      _
    $region7: #{optimized_lstm_forward.1} parent=1 // pred_check_branch
      %14 = sbr.rel (0) target = $region9
    $region8: #{optimized_lstm_forward.1} parent=1 // pred_region
      _
    $region9: #{optimized_lstm_forward.1} parent=1 // pred_fallthru
      _
    // Predicated region
    $region10: #{optimized_lstm_forward.1} parent=1 // pred_check
      _
    $region11: #{optimized_lstm_forward.1} parent=1 // pred_check_branch
      %16 = sbr.rel (0) target = $region13
    $region12: #{optimized_lstm_forward.1} parent=1 // pred_region
      %s18 = ssub.s32 2048, 2048
      %19 = vsyncadd [#allocation5], %s18
      %s20 = sshll.u32 [#allocation4], 4
      %s21 = int_to_ptr.vmem [resolvable:$true] %s20
      %26 = dma.hbm_to_vmem [thread:$0]  %s2, 2048, %s21, [#allocation5], 128, 128, 8
    $region13: #{optimized_lstm_forward.1} parent=1 // pred_fallthru
      _
    // Predicated region
    $region14: #{optimized_lstm_forward.1} parent=1 // pred_check
      _
    $region15: #{optimized_lstm_forward.1} parent=1 // pred_check_branch
      %28 = sbr.rel (0) target = $region17
    $region16: #{optimized_lstm_forward.1} parent=1 // pred_region
      _
    $region17: #{optimized_lstm_forward.1} parent=1 // pred_fallthru
      _
    // Predicated region
    $region18: #{optimized_lstm_forward.1} parent=1 // pred_check
      _
    $region19: #{optimized_lstm_forward.1} parent=1 // pred_check_branch
      %30 = sbr.rel (0) target = $region21
    $region20: #{optimized_lstm_forward.1} parent=1 // pred_region
      %31 = dma.done [#allocation5], 2048
    $region21: #{optimized_lstm_forward.1} parent=1 // pred_fallthru
      _
    %p32 = scmp.eq.s32.totalorder 0, 0
    // Predicated region
    $region22: #{optimized_lstm_forward.1} parent=1 // pred_check
      %p33 = pneg %p32
    $region23: #{optimized_lstm_forward.1} parent=1 // pred_check_branch
      %35 = sbr.rel (%p33) target = $region25
    $region24: #{optimized_lstm_forward.1} parent=1 // pred_region
      %36 = vst [vmem:[#allocation2] sm:$0x3] 0.0
      %37 = vst [vmem:[#allocation3] sm:$0x3] 0.0
    $region25: #{optimized_lstm_forward.1} parent=1 // pred_fallthru
      _
    %v38 = vld [vmem:[%s1] sm:$0xff]
    %v39 = vld [vmem:[%s1 + $0x8] sm:$0xff]
    %v40 = vld [vmem:[%s1 + $0x10] sm:$0xff]
    %v41 = vld [vmem:[%s1 + $0x18] sm:$0xff]
    %v42 = vld [vmem:[%s1 + $0x20] sm:$0xff]
    %v43 = vld [vmem:[%s1 + $0x28] sm:$0xff]
    %v44 = vld [vmem:[%s1 + $0x30] sm:$0xff]
    %v45 = vld [vmem:[%s1 + $0x38] sm:$0xff]
    %v46 = vld [vmem:[%s1 + $0x40] sm:$0xff]
    %v47 = vld [vmem:[%s1 + $0x48] sm:$0xff]
    %v48 = vld [vmem:[%s1 + $0x50] sm:$0xff]
    %v49 = vld [vmem:[%s1 + $0x58] sm:$0xff]
    %v50 = vld [vmem:[%s1 + $0x60] sm:$0xff]
    %v51 = vld [vmem:[%s1 + $0x68] sm:$0xff]
    %v52 = vld [vmem:[%s1 + $0x70] sm:$0xff]
    %v53 = vld [vmem:[%s1 + $0x78] sm:$0xff]
    %v54 = vld [vmem:[%s1 + $0x80] sm:$0xff]
    %v55 = vld [vmem:[%s1 + $0x88] sm:$0xff]
    %v56 = vld [vmem:[%s1 + $0x90] sm:$0xff]
    %v57 = vld [vmem:[%s1 + $0x98] sm:$0xff]
    %v58 = vld [vmem:[%s1 + $0xa0] sm:$0xff]
    %v59 = vld [vmem:[%s1 + $0xa8] sm:$0xff]
    %v60 = vld [vmem:[%s1 + $0xb0] sm:$0xff]
    %v61 = vld [vmem:[%s1 + $0xb8] sm:$0xff]
    %v62 = vld [vmem:[%s1 + $0xc0] sm:$0xff]
    %v63 = vld [vmem:[%s1 + $0xc8] sm:$0xff]
    %v64 = vld [vmem:[%s1 + $0xd0] sm:$0xff]
    %v65 = vld [vmem:[%s1 + $0xd8] sm:$0xff]
    %v66 = vld [vmem:[%s1 + $0xe0] sm:$0xff]
    %v67 = vld [vmem:[%s1 + $0xe8] sm:$0xff]
    %v68 = vld [vmem:[%s1 + $0xf0] sm:$0xff]
    %v69 = vld [vmem:[%s1 + $0xf8] sm:$0xff]
    %v70 = vld [vmem:[%s1 + $0x100] sm:$0xff]
    %v71 = vld [vmem:[%s1 + $0x108] sm:$0xff]
    %v72 = vld [vmem:[%s1 + $0x110] sm:$0xff]
    %v73 = vld [vmem:[%s1 + $0x118] sm:$0xff]
    %v74 = vld [vmem:[%s1 + $0x120] sm:$0xff]
    %v75 = vld [vmem:[%s1 + $0x128] sm:$0xff]
    %v76 = vld [vmem:[%s1 + $0x130] sm:$0xff]
    %v77 = vld [vmem:[%s1 + $0x138] sm:$0xff]
    %v78 = vld [vmem:[%s1 + $0x140] sm:$0xff]
    %v79 = vld [vmem:[%s1 + $0x148] sm:$0xff]
    %v80 = vld [vmem:[%s1 + $0x150] sm:$0xff]
    %v81 = vld [vmem:[%s1 + $0x158] sm:$0xff]
    %v82 = vld [vmem:[%s1 + $0x160] sm:$0xff]
    %v83 = vld [vmem:[%s1 + $0x168] sm:$0xff]
    %v84 = vld [vmem:[%s1 + $0x170] sm:$0xff]
    %v85 = vld [vmem:[%s1 + $0x178] sm:$0xff]
    %v86 = vld [vmem:[%s1 + $0x180] sm:$0xff]
    %v87 = vld [vmem:[%s1 + $0x188] sm:$0xff]
    %v88 = vld [vmem:[%s1 + $0x190] sm:$0xff]
    %v89 = vld [vmem:[%s1 + $0x198] sm:$0xff]
    %v90 = vld [vmem:[%s1 + $0x1a0] sm:$0xff]
    %v91 = vld [vmem:[%s1 + $0x1a8] sm:$0xff]
    %v92 = vld [vmem:[%s1 + $0x1b0] sm:$0xff]
    %v93 = vld [vmem:[%s1 + $0x1b8] sm:$0xff]
    %v94 = vld [vmem:[%s1 + $0x1c0] sm:$0xff]
    %v95 = vld [vmem:[%s1 + $0x1c8] sm:$0xff]
    %v96 = vld [vmem:[%s1 + $0x1d0] sm:$0xff]
    %v97 = vld [vmem:[%s1 + $0x1d8] sm:$0xff]
    %v98 = vld [vmem:[%s1 + $0x1e0] sm:$0xff]
    %v99 = vld [vmem:[%s1 + $0x1e8] sm:$0xff]
    %v100 = vld [vmem:[%s1 + $0x1f0] sm:$0xff]
    %v101 = vld [vmem:[%s1 + $0x1f8] sm:$0xff]
    %v102 = vld [vmem:[#allocation2] sm:$0x3]
    %v103 = vld [vmem:[#allocation3] sm:$0x3]
    %v104 = vld [vmem:[%s0] sm:$0xf]
    %v105 = vunpack.c.l.bf16 %v104
    %106 = vmatprep.subr.mxu0 %v39
    %107 = vmatpush1.msra.mxu0 %v38
    %108 = vmatprep.subr.mxu0 %v43
    %109 = vmatpush1.msra.mxu0 %v42
    %110 = vmatprep.subr.mxu0 %v47
    %111 = vmatpush1.msra.mxu0 %v46
    %112 = vmatprep.subr.mxu0 %v51
    %113 = vmatpush1.msra.mxu0 %v50
    %114 = vmatprep.subr.mxu0 %v55
    %115 = vmatpush1.msra.mxu0 %v54
    %116 = vmatprep.subr.mxu0 %v59
    %117 = vmatpush1.msra.mxu0 %v58
    %118 = vmatprep.subr.mxu0 %v63
    %119 = vmatpush1.msra.mxu0 %v62
    %120 = vmatprep.subr.mxu0 %v67
    %121 = vmatpush1.msra.mxu0 %v66
    %122 = vmatprep.subr.mxu0 %v71
    %123 = vmatpush1.msra.mxu0 %v70
    %124 = vmatprep.subr.mxu0 %v75
    %125 = vmatpush1.msra.mxu0 %v74
    %126 = vmatprep.subr.mxu0 %v79
    %127 = vmatpush1.msra.mxu0 %v78
    %128 = vmatprep.subr.mxu0 %v83
    %129 = vmatpush1.msra.mxu0 %v82
    %130 = vmatprep.subr.mxu0 %v87
    %131 = vmatpush1.msra.mxu0 %v86
    %132 = vmatprep.subr.mxu0 %v91
    %133 = vmatpush1.msra.mxu0 %v90
    %134 = vmatprep.subr.mxu0 %v95
    %135 = vmatpush1.msra.mxu0 %v94
    %136 = vmatprep.subr.mxu0 %v99
    %137 = vmatpush1.msra.mxu0 %v98
    %138 = vmatprep.subr.mxu0 0.0
    %139 = vmatpush1.msra.mxu0 0.0
    %140 = vmatprep.subr.mxu0 0.0
    %141 = vmatpush1.msra.mxu0 0.0
    %142 = vmatprep.subr.mxu0 0.0
    %143 = vmatpush1.msra.mxu0 0.0
    %144 = vmatprep.subr.mxu0 0.0
    %145 = vmatpush1.msra.mxu0 0.0
    %146 = vmatprep.subr.mxu0 0.0
    %147 = vmatpush1.msra.mxu0 0.0
    %148 = vmatprep.subr.mxu0 0.0
    %149 = vmatpush1.msra.mxu0 0.0
    %150 = vmatprep.subr.mxu0 0.0
    %151 = vmatpush1.msra.mxu0 0.0
    %152 = vmatprep.subr.mxu0 0.0
    %153 = vmatpush1.msra.mxu0 0.0
    %154 = vmatprep.subr.mxu0 0.0
    %155 = vmatpush1.msra.mxu0 0.0
    %156 = vmatprep.subr.mxu0 0.0
    %157 = vmatpush1.msra.mxu0 0.0
    %158 = vmatprep.subr.mxu0 0.0
    %159 = vmatpush1.msra.mxu0 0.0
    %160 = vmatprep.subr.mxu0 0.0
    %161 = vmatpush1.msra.mxu0 0.0
    %162 = vmatprep.subr.mxu0 0.0
    %163 = vmatpush1.msra.mxu0 0.0
    %164 = vmatprep.subr.mxu0 0.0
    %165 = vmatpush1.msra.mxu0 0.0
    %166 = vmatprep.subr.mxu0 0.0
    %167 = vmatpush1.msra.mxu0 0.0
    %168 = vmatprep.subr.mxu0 0.0
    %169 = vmatpush1.msra.mxu0 0.0
    %170 = vmatprep.mubr.f32.mxu0 0.0
    %171 = vmatmul.mubr.f32.gmra.mrb[0].mxu0 %v102
    %v172 = vpop.f32.mrb[0].mxu0
    %v173 = vadd.f32 0.0, %v172
    %v174 = vpop.f32.mrb[0].mxu0
    %v175 = vadd.f32 0.0, %v174
    %176 = vdwg.mxu0
    %177 = vmatprep.subr.mxu0 %v41
    %178 = vmatpush1.msra.mxu0 %v40
    %179 = vmatprep.subr.mxu0 %v45
    %180 = vmatpush1.msra.mxu0 %v44
    %181 = vmatprep.subr.mxu0 %v49
    %182 = vmatpush1.msra.mxu0 %v48
    %183 = vmatprep.subr.mxu0 %v53
    %184 = vmatpush1.msra.mxu0 %v52
    %185 = vmatprep.subr.mxu0 %v57
    %186 = vmatpush1.msra.mxu0 %v56
    %187 = vmatprep.subr.mxu0 %v61
    %188 = vmatpush1.msra.mxu0 %v60
    %189 = vmatprep.subr.mxu0 %v65
    %190 = vmatpush1.msra.mxu0 %v64
    %191 = vmatprep.subr.mxu0 %v69
    %192 = vmatpush1.msra.mxu0 %v68
    %193 = vmatprep.subr.mxu0 %v73
    %194 = vmatpush1.msra.mxu0 %v72
    %195 = vmatprep.subr.mxu0 %v77
    %196 = vmatpush1.msra.mxu0 %v76
    %197 = vmatprep.subr.mxu0 %v81
    %198 = vmatpush1.msra.mxu0 %v80
    %199 = vmatprep.subr.mxu0 %v85
    %200 = vmatpush1.msra.mxu0 %v84
    %201 = vmatprep.subr.mxu0 %v89
    %202 = vmatpush1.msra.mxu0 %v88
    %203 = vmatprep.subr.mxu0 %v93
    %204 = vmatpush1.msra.mxu0 %v92
    %205 = vmatprep.subr.mxu0 %v97
    %206 = vmatpush1.msra.mxu0 %v96
    %207 = vmatprep.subr.mxu0 %v101
    %208 = vmatpush1.msra.mxu0 %v100
    %209 = vmatprep.subr.mxu0 0.0
    %210 = vmatpush1.msra.mxu0 0.0
    %211 = vmatprep.subr.mxu0 0.0
    %212 = vmatpush1.msra.mxu0 0.0
    %213 = vmatprep.subr.mxu0 0.0
    %214 = vmatpush1.msra.mxu0 0.0
    %215 = vmatprep.subr.mxu0 0.0
    %216 = vmatpush1.msra.mxu0 0.0
    %217 = vmatprep.subr.mxu0 0.0
    %218 = vmatpush1.msra.mxu0 0.0
    %219 = vmatprep.subr.mxu0 0.0
    %220 = vmatpush1.msra.mxu0 0.0
    %221 = vmatprep.subr.mxu0 0.0
    %222 = vmatpush1.msra.mxu0 0.0
    %223 = vmatprep.subr.mxu0 0.0
    %224 = vmatpush1.msra.mxu0 0.0
    %225 = vmatprep.subr.mxu0 0.0
    %226 = vmatpush1.msra.mxu0 0.0
    %227 = vmatprep.subr.mxu0 0.0
    %228 = vmatpush1.msra.mxu0 0.0
    %229 = vmatprep.subr.mxu0 0.0
    %230 = vmatpush1.msra.mxu0 0.0
    %231 = vmatprep.subr.mxu0 0.0
    %232 = vmatpush1.msra.mxu0 0.0
    %233 = vmatprep.subr.mxu0 0.0
    %234 = vmatpush1.msra.mxu0 0.0
    %235 = vmatprep.subr.mxu0 0.0
    %236 = vmatpush1.msra.mxu0 0.0
    %237 = vmatprep.subr.mxu0 0.0
    %238 = vmatpush1.msra.mxu0 0.0
    %239 = vmatprep.subr.mxu0 0.0
    %240 = vmatpush1.msra.mxu0 0.0
    %241 = vmatprep.mubr.f32.mxu0 0.0
    %242 = vmatmul.mubr.f32.gmra.mrb[0].mxu0 %v102
    %v243 = vpop.f32.mrb[0].mxu0
    %v244 = vadd.f32 0.0, %v243
    %v245 = vpop.f32.mrb[0].mxu0
    %v246 = vadd.f32 0.0, %v245
    %247 = vdwg.mxu0
    %v252 = vcombine.low %v173, %v175
    %v253 = vcombine.low %v244, %v246
    %v255 = vunpack.c.l.s4 1983009808
    %v256 = vunpack.c.0.s8 %v255
    %v257 = vlaneseq
    %v258 = vshrl.u32 %v257, 7
    %v259 = vsub.s32 %v256, %v258
    %v260 = vrot.slane %v252, %v259
    %v262 = vunpack.c.l.s4 1983009808
    %v263 = vunpack.c.0.s8 %v262
    %v264 = vlaneseq
    %v265 = vshrl.u32 %v264, 7
    %v266 = vsub.s32 %v263, %v265
    %v267 = vrot.slane %v253, %v266
    %v268 = vcombine.low %v260, %v267
    %v270 = vadd.f32 %v105, %v268
    %v271 = vxor.u32 %v270, 2147483648
    %v272 = vmul.f32 %v271, 1.442695
    %v273 = vpow.pop %v272
    %v274 = vadd.f32 %v273, 1.0
    %v275 = vrcp.pop %v274
    %v276 = vmul.f32 1.0, %v275
    %v278 = vrot.slane %v270, 2
    %v280 = vxor.u32 %v278, 2147483648
    %v281 = vmul.f32 %v280, 1.442695
    %v282 = vpow.pop %v281
    %v283 = vadd.f32 %v282, 1.0
    %v284 = vrcp.pop %v283
    %v285 = vmul.f32 1.0, %v284
    %v286 = vrot.slane %v270, 4
    %v288 = vtanh.pop %v286
    %v289 = vrot.slane %v270, 6
    %v291 = vxor.u32 %v289, 2147483648
    %v292 = vmul.f32 %v291, 1.442695
    %v293 = vpow.pop %v292
    %v294 = vadd.f32 %v293, 1.0
    %v295 = vrcp.pop %v294
    %v296 = vmul.f32 1.0, %v295
    %v297 = vmul.f32 %v285, %v103
    %v298 = vmul.f32 %v276, %v288
    %v299 = vadd.f32 %v297, %v298
    %v300 = vtanh.pop %v299
    %v301 = vmul.f32 %v296, %v300
    %s302 = scalar_lea.vmem %s0, 4
    %v303 = vld [vmem:[%s302] sm:$0xf]
    %v304 = vunpack.c.l.bf16 %v303
    %305 = vmatprep.subr.mxu0 %v39
    %306 = vmatpush1.msra.mxu0 %v38
    %307 = vmatprep.subr.mxu0 %v43
    %308 = vmatpush1.msra.mxu0 %v42
    %309 = vmatprep.subr.mxu0 %v47
    %310 = vmatpush1.msra.mxu0 %v46
    %311 = vmatprep.subr.mxu0 %v51
    %312 = vmatpush1.msra.mxu0 %v50
    %313 = vmatprep.subr.mxu0 %v55
    %314 = vmatpush1.msra.mxu0 %v54
    %315 = vmatprep.subr.mxu0 %v59
    %316 = vmatpush1.msra.mxu0 %v58
    %317 = vmatprep.subr.mxu0 %v63
    %318 = vmatpush1.msra.mxu0 %v62
    %319 = vmatprep.subr.mxu0 %v67
    %320 = vmatpush1.msra.mxu0 %v66
    %321 = vmatprep.subr.mxu0 %v71
    %322 = vmatpush1.msra.mxu0 %v70
    %323 = vmatprep.subr.mxu0 %v75
    %324 = vmatpush1.msra.mxu0 %v74
    %325 = vmatprep.subr.mxu0 %v79
    %326 = vmatpush1.msra.mxu0 %v78
    %327 = vmatprep.subr.mxu0 %v83
    %328 = vmatpush1.msra.mxu0 %v82
    %329 = vmatprep.subr.mxu0 %v87
    %330 = vmatpush1.msra.mxu0 %v86
    %331 = vmatprep.subr.mxu0 %v91
    %332 = vmatpush1.msra.mxu0 %v90
    %333 = vmatprep.subr.mxu0 %v95
    %334 = vmatpush1.msra.mxu0 %v94
    %335 = vmatprep.subr.mxu0 %v99
    %336 = vmatpush1.msra.mxu0 %v98
    %337 = vmatprep.subr.mxu0 0.0
    %338 = vmatpush1.msra.mxu0 0.0
    %339 = vmatprep.subr.mxu0 0.0
    %340 = vmatpush1.msra.mxu0 0.0
    %341 = vmatprep.subr.mxu0 0.0
    %342 = vmatpush1.msra.mxu0 0.0
    %343 = vmatprep.subr.mxu0 0.0
    %344 = vmatpush1.msra.mxu0 0.0
    %345 = vmatprep.subr.mxu0 0.0
    %346 = vmatpush1.msra.mxu0 0.0
    %347 = vmatprep.subr.mxu0 0.0
    %348 = vmatpush1.msra.mxu0 0.0
    %349 = vmatprep.subr.mxu0 0.0
    %350 = vmatpush1.msra.mxu0 0.0
    %351 = vmatprep.subr.mxu0 0.0
    %352 = vmatpush1.msra.mxu0 0.0
    %353 = vmatprep.subr.mxu0 0.0
    %354 = vmatpush1.msra.mxu0 0.0
    %355 = vmatprep.subr.mxu0 0.0
    %356 = vmatpush1.msra.mxu0 0.0
    %357 = vmatprep.subr.mxu0 0.0
    %358 = vmatpush1.msra.mxu0 0.0
    %359 = vmatprep.subr.mxu0 0.0
    %360 = vmatpush1.msra.mxu0 0.0
    %361 = vmatprep.subr.mxu0 0.0
    %362 = vmatpush1.msra.mxu0 0.0
    %363 = vmatprep.subr.mxu0 0.0
    %364 = vmatpush1.msra.mxu0 0.0
    %365 = vmatprep.subr.mxu0 0.0
    %366 = vmatpush1.msra.mxu0 0.0
    %367 = vmatprep.subr.mxu0 0.0
    %368 = vmatpush1.msra.mxu0 0.0
    %369 = vmatprep.mubr.f32.mxu0 0.0
    %370 = vmatmul.mubr.f32.gmra.mrb[0].mxu0 %v301
    %v371 = vpop.f32.mrb[0].mxu0
    %v372 = vadd.f32 0.0, %v371
    %v373 = vpop.f32.mrb[0].mxu0
    %v374 = vadd.f32 0.0, %v373
    %375 = vdwg.mxu0
    %376 = vmatprep.subr.mxu0 %v41
    %377 = vmatpush1.msra.mxu0 %v40
    %378 = vmatprep.subr.mxu0 %v45
    %379 = vmatpush1.msra.mxu0 %v44
    %380 = vmatprep.subr.mxu0 %v49
    %381 = vmatpush1.msra.mxu0 %v48
    %382 = vmatprep.subr.mxu0 %v53
    %383 = vmatpush1.msra.mxu0 %v52
    %384 = vmatprep.subr.mxu0 %v57
    %385 = vmatpush1.msra.mxu0 %v56
    %386 = vmatprep.subr.mxu0 %v61
    %387 = vmatpush1.msra.mxu0 %v60
    %388 = vmatprep.subr.mxu0 %v65
    %389 = vmatpush1.msra.mxu0 %v64
    %390 = vmatprep.subr.mxu0 %v69
    %391 = vmatpush1.msra.mxu0 %v68
    %392 = vmatprep.subr.mxu0 %v73
    %393 = vmatpush1.msra.mxu0 %v72
    %394 = vmatprep.subr.mxu0 %v77
    %395 = vmatpush1.msra.mxu0 %v76
    %396 = vmatprep.subr.mxu0 %v81
    %397 = vmatpush1.msra.mxu0 %v80
    %398 = vmatprep.subr.mxu0 %v85
    %399 = vmatpush1.msra.mxu0 %v84
    %400 = vmatprep.subr.mxu0 %v89
    %401 = vmatpush1.msra.mxu0 %v88
    %402 = vmatprep.subr.mxu0 %v93
    %403 = vmatpush1.msra.mxu0 %v92
    %404 = vmatprep.subr.mxu0 %v97
    %405 = vmatpush1.msra.mxu0 %v96
    %406 = vmatprep.subr.mxu0 %v101
    %407 = vmatpush1.msra.mxu0 %v100
    %408 = vmatprep.subr.mxu0 0.0
    %409 = vmatpush1.msra.mxu0 0.0
    %410 = vmatprep.subr.mxu0 0.0
    %411 = vmatpush1.msra.mxu0 0.0
    %412 = vmatprep.subr.mxu0 0.0
    %413 = vmatpush1.msra.mxu0 0.0
    %414 = vmatprep.subr.mxu0 0.0
    %415 = vmatpush1.msra.mxu0 0.0
    %416 = vmatprep.subr.mxu0 0.0
    %417 = vmatpush1.msra.mxu0 0.0
    %418 = vmatprep.subr.mxu0 0.0
    %419 = vmatpush1.msra.mxu0 0.0
    %420 = vmatprep.subr.mxu0 0.0
    %421 = vmatpush1.msra.mxu0 0.0
    %422 = vmatprep.subr.mxu0 0.0
    %423 = vmatpush1.msra.mxu0 0.0
    %424 = vmatprep.subr.mxu0 0.0
    %425 = vmatpush1.msra.mxu0 0.0
    %426 = vmatprep.subr.mxu0 0.0
    %427 = vmatpush1.msra.mxu0 0.0
    %428 = vmatprep.subr.mxu0 0.0
    %429 = vmatpush1.msra.mxu0 0.0
    %430 = vmatprep.subr.mxu0 0.0
    %431 = vmatpush1.msra.mxu0 0.0
    %432 = vmatprep.subr.mxu0 0.0
    %433 = vmatpush1.msra.mxu0 0.0
    %434 = vmatprep.subr.mxu0 0.0
    %435 = vmatpush1.msra.mxu0 0.0
    %436 = vmatprep.subr.mxu0 0.0
    %437 = vmatpush1.msra.mxu0 0.0
    %438 = vmatprep.subr.mxu0 0.0
    %439 = vmatpush1.msra.mxu0 0.0
    %440 = vmatprep.mubr.f32.mxu0 0.0
    %441 = vmatmul.mubr.f32.gmra.mrb[0].mxu0 %v301
    %v442 = vpop.f32.mrb[0].mxu0
    %v443 = vadd.f32 0.0, %v442
    %v444 = vpop.f32.mrb[0].mxu0
    %v445 = vadd.f32 0.0, %v444
    %446 = vdwg.mxu0
    %v451 = vcombine.low %v372, %v374
    %v452 = vcombine.low %v443, %v445
    %v454 = vunpack.c.l.s4 1983009808
    %v455 = vunpack.c.0.s8 %v454
    %v456 = vlaneseq
    %v457 = vshrl.u32 %v456, 7
    %v458 = vsub.s32 %v455, %v457
    %v459 = vrot.slane %v451, %v458
    %v461 = vunpack.c.l.s4 1983009808
    %v462 = vunpack.c.0.s8 %v461
    %v463 = vlaneseq
    %v464 = vshrl.u32 %v463, 7
    %v465 = vsub.s32 %v462, %v464
    %v466 = vrot.slane %v452, %v465
    %v467 = vcombine.low %v459, %v466
    %v469 = vadd.f32 %v304, %v467
    %v470 = vxor.u32 %v469, 2147483648
    %v471 = vmul.f32 %v470, 1.442695
    %v472 = vpow.pop %v471
    %v473 = vadd.f32 %v472, 1.0
    %v474 = vrcp.pop %v473
    %v475 = vmul.f32 1.0, %v474
    %v477 = vrot.slane %v469, 2
    %v479 = vxor.u32 %v477, 2147483648
    %v480 = vmul.f32 %v479, 1.442695
    %v481 = vpow.pop %v480
    %v482 = vadd.f32 %v481, 1.0
    %v483 = vrcp.pop %v482
    %v484 = vmul.f32 1.0, %v483
    %v485 = vrot.slane %v469, 4
    %v487 = vtanh.pop %v485
    %v488 = vrot.slane %v469, 6
    %v490 = vxor.u32 %v488, 2147483648
    %v491 = vmul.f32 %v490, 1.442695
    %v492 = vpow.pop %v491
    %v493 = vadd.f32 %v492, 1.0
    %v494 = vrcp.pop %v493
    %v495 = vmul.f32 1.0, %v494
    %v496 = vmul.f32 %v484, %v299
    %v497 = vmul.f32 %v475, %v487
    %v498 = vadd.f32 %v496, %v497
    %v499 = vtanh.pop %v498
    %v500 = vmul.f32 %v495, %v499
    %s501 = scalar_lea.vmem %s0, 8
    %v502 = vld [vmem:[%s501] sm:$0xf]
    %v503 = vunpack.c.l.bf16 %v502
    %504 = vmatprep.subr.mxu0 %v39
    %505 = vmatpush1.msra.mxu0 %v38
    %506 = vmatprep.subr.mxu0 %v43
    %507 = vmatpush1.msra.mxu0 %v42
    %508 = vmatprep.subr.mxu0 %v47
    %509 = vmatpush1.msra.mxu0 %v46
    %510 = vmatprep.subr.mxu0 %v51
    %511 = vmatpush1.msra.mxu0 %v50
    %512 = vmatprep.subr.mxu0 %v55
    %513 = vmatpush1.msra.mxu0 %v54
    %514 = vmatprep.subr.mxu0 %v59
    %515 = vmatpush1.msra.mxu0 %v58
    %516 = vmatprep.subr.mxu0 %v63
    %517 = vmatpush1.msra.mxu0 %v62
    %518 = vmatprep.subr.mxu0 %v67
    %519 = vmatpush1.msra.mxu0 %v66
    %520 = vmatprep.subr.mxu0 %v71
    %521 = vmatpush1.msra.mxu0 %v70
    %522 = vmatprep.subr.mxu0 %v75
    %523 = vmatpush1.msra.mxu0 %v74
    %524 = vmatprep.subr.mxu0 %v79
    %525 = vmatpush1.msra.mxu0 %v78
    %526 = vmatprep.subr.mxu0 %v83
    %527 = vmatpush1.msra.mxu0 %v82
    %528 = vmatprep.subr.mxu0 %v87
    %529 = vmatpush1.msra.mxu0 %v86
    %530 = vmatprep.subr.mxu0 %v91
    %531 = vmatpush1.msra.mxu0 %v90
    %532 = vmatprep.subr.mxu0 %v95
    %533 = vmatpush1.msra.mxu0 %v94
    %534 = vmatprep.subr.mxu0 %v99
    %535 = vmatpush1.msra.mxu0 %v98
    %536 = vmatprep.subr.mxu0 0.0
    %537 = vmatpush1.msra.mxu0 0.0
    %538 = vmatprep.subr.mxu0 0.0
    %539 = vmatpush1.msra.mxu0 0.0
    %540 = vmatprep.subr.mxu0 0.0
    %541 = vmatpush1.msra.mxu0 0.0
    %542 = vmatprep.subr.mxu0 0.0
    %543 = vmatpush1.msra.mxu0 0.0
    %544 = vmatprep.subr.mxu0 0.0
    %545 = vmatpush1.msra.mxu0 0.0
    %546 = vmatprep.subr.mxu0 0.0
    %547 = vmatpush1.msra.mxu0 0.0
    %548 = vmatprep.subr.mxu0 0.0
    %549 = vmatpush1.msra.mxu0 0.0
    %550 = vmatprep.subr.mxu0 0.0
    %551 = vmatpush1.msra.mxu0 0.0
    %552 = vmatprep.subr.mxu0 0.0
    %553 = vmatpush1.msra.mxu0 0.0
    %554 = vmatprep.subr.mxu0 0.0
    %555 = vmatpush1.msra.mxu0 0.0
    %556 = vmatprep.subr.mxu0 0.0
    %557 = vmatpush1.msra.mxu0 0.0
    %558 = vmatprep.subr.mxu0 0.0
    %559 = vmatpush1.msra.mxu0 0.0
    %560 = vmatprep.subr.mxu0 0.0
    %561 = vmatpush1.msra.mxu0 0.0
    %562 = vmatprep.subr.mxu0 0.0
    %563 = vmatpush1.msra.mxu0 0.0
    %564 = vmatprep.subr.mxu0 0.0
    %565 = vmatpush1.msra.mxu0 0.0
    %566 = vmatprep.subr.mxu0 0.0
    %567 = vmatpush1.msra.mxu0 0.0
    %568 = vmatprep.mubr.f32.mxu0 0.0
    %569 = vmatmul.mubr.f32.gmra.mrb[0].mxu0 %v500
    %v570 = vpop.f32.mrb[0].mxu0
    %v571 = vadd.f32 0.0, %v570
    %v572 = vpop.f32.mrb[0].mxu0
    %v573 = vadd.f32 0.0, %v572
    %574 = vdwg.mxu0
    %575 = vmatprep.subr.mxu0 %v41
    %576 = vmatpush1.msra.mxu0 %v40
    %577 = vmatprep.subr.mxu0 %v45
    %578 = vmatpush1.msra.mxu0 %v44
    %579 = vmatprep.subr.mxu0 %v49
    %580 = vmatpush1.msra.mxu0 %v48
    %581 = vmatprep.subr.mxu0 %v53
    %582 = vmatpush1.msra.mxu0 %v52
    %583 = vmatprep.subr.mxu0 %v57
    %584 = vmatpush1.msra.mxu0 %v56
    %585 = vmatprep.subr.mxu0 %v61
    %586 = vmatpush1.msra.mxu0 %v60
    %587 = vmatprep.subr.mxu0 %v65
    %588 = vmatpush1.msra.mxu0 %v64
    %589 = vmatprep.subr.mxu0 %v69
    %590 = vmatpush1.msra.mxu0 %v68
    %591 = vmatprep.subr.mxu0 %v73
    %592 = vmatpush1.msra.mxu0 %v72
    %593 = vmatprep.subr.mxu0 %v77
    %594 = vmatpush1.msra.mxu0 %v76
    %595 = vmatprep.subr.mxu0 %v81
    %596 = vmatpush1.msra.mxu0 %v80
    %597 = vmatprep.subr.mxu0 %v85
    %598 = vmatpush1.msra.mxu0 %v84
    %599 = vmatprep.subr.mxu0 %v89
    %600 = vmatpush1.msra.mxu0 %v88
    %601 = vmatprep.subr.mxu0 %v93
    %602 = vmatpush1.msra.mxu0 %v92
    %603 = vmatprep.subr.mxu0 %v97
    %604 = vmatpush1.msra.mxu0 %v96
    %605 = vmatprep.subr.mxu0 %v101
    %606 = vmatpush1.msra.mxu0 %v100
    %607 = vmatprep.subr.mxu0 0.0
    %608 = vmatpush1.msra.mxu0 0.0
    %609 = vmatprep.subr.mxu0 0.0
    %610 = vmatpush1.msra.mxu0 0.0
    %611 = vmatprep.subr.mxu0 0.0
    %612 = vmatpush1.msra.mxu0 0.0
    %613 = vmatprep.subr.mxu0 0.0
    %614 = vmatpush1.msra.mxu0 0.0
    %615 = vmatprep.subr.mxu0 0.0
    %616 = vmatpush1.msra.mxu0 0.0
    %617 = vmatprep.subr.mxu0 0.0
    %618 = vmatpush1.msra.mxu0 0.0
    %619 = vmatprep.subr.mxu0 0.0
    %620 = vmatpush1.msra.mxu0 0.0
    %621 = vmatprep.subr.mxu0 0.0
    %622 = vmatpush1.msra.mxu0 0.0
    %623 = vmatprep.subr.mxu0 0.0
    %624 = vmatpush1.msra.mxu0 0.0
    %625 = vmatprep.subr.mxu0 0.0
    %626 = vmatpush1.msra.mxu0 0.0
    %627 = vmatprep.subr.mxu0 0.0
    %628 = vmatpush1.msra.mxu0 0.0
    %629 = vmatprep.subr.mxu0 0.0
    %630 = vmatpush1.msra.mxu0 0.0
    %631 = vmatprep.subr.mxu0 0.0
    %632 = vmatpush1.msra.mxu0 0.0
    %633 = vmatprep.subr.mxu0 0.0
    %634 = vmatpush1.msra.mxu0 0.0
    %635 = vmatprep.subr.mxu0 0.0
    %636 = vmatpush1.msra.mxu0 0.0
    %637 = vmatprep.subr.mxu0 0.0
    %638 = vmatpush1.msra.mxu0 0.0
    %639 = vmatprep.mubr.f32.mxu0 0.0
    %640 = vmatmul.mubr.f32.gmra.mrb[0].mxu0 %v500
    %v641 = vpop.f32.mrb[0].mxu0
    %v642 = vadd.f32 0.0, %v641
    %v643 = vpop.f32.mrb[0].mxu0
    %v644 = vadd.f32 0.0, %v643
    %645 = vdwg.mxu0
    %v650 = vcombine.low %v571, %v573
    %v651 = vcombine.low %v642, %v644
    %v653 = vunpack.c.l.s4 1983009808
    %v654 = vunpack.c.0.s8 %v653
    %v655 = vlaneseq
    %v656 = vshrl.u32 %v655, 7
    %v657 = vsub.s32 %v654, %v656
    %v658 = vrot.slane %v650, %v657
    %v660 = vunpack.c.l.s4 1983009808
    %v661 = vunpack.c.0.s8 %v660
    %v662 = vlaneseq
    %v663 = vshrl.u32 %v662, 7
    %v664 = vsub.s32 %v661, %v663
    %v665 = vrot.slane %v651, %v664
    %v666 = vcombine.low %v658, %v665
    %v668 = vadd.f32 %v503, %v666
    %v669 = vxor.u32 %v668, 2147483648
    %v670 = vmul.f32 %v669, 1.442695
    %v671 = vpow.pop %v670
    %v672 = vadd.f32 %v671, 1.0
    %v673 = vrcp.pop %v672
    %v674 = vmul.f32 1.0, %v673
    %v676 = vrot.slane %v668, 2
    %v678 = vxor.u32 %v676, 2147483648
    %v679 = vmul.f32 %v678, 1.442695
    %v680 = vpow.pop %v679
    %v681 = vadd.f32 %v680, 1.0
    %v682 = vrcp.pop %v681
    %v683 = vmul.f32 1.0, %v682
    %v684 = vrot.slane %v668, 4
    %v686 = vtanh.pop %v684
    %v687 = vrot.slane %v668, 6
    %v689 = vxor.u32 %v687, 2147483648
    %v690 = vmul.f32 %v689, 1.442695
    %v691 = vpow.pop %v690
    %v692 = vadd.f32 %v691, 1.0
    %v693 = vrcp.pop %v692
    %v694 = vmul.f32 1.0, %v693
    %v695 = vmul.f32 %v683, %v498
    %v696 = vmul.f32 %v674, %v686
    %v697 = vadd.f32 %v695, %v696
    %v698 = vtanh.pop %v697
    %v699 = vmul.f32 %v694, %v698
    %s700 = scalar_lea.vmem %s0, 12
    %v701 = vld [vmem:[%s700] sm:$0xf]
    %v702 = vunpack.c.l.bf16 %v701
    %703 = vmatprep.subr.mxu0 %v39
    %704 = vmatpush1.msra.mxu0 %v38
    %705 = vmatprep.subr.mxu0 %v43
    %706 = vmatpush1.msra.mxu0 %v42
    %707 = vmatprep.subr.mxu0 %v47
    %708 = vmatpush1.msra.mxu0 %v46
    %709 = vmatprep.subr.mxu0 %v51
    %710 = vmatpush1.msra.mxu0 %v50
    %711 = vmatprep.subr.mxu0 %v55
    %712 = vmatpush1.msra.mxu0 %v54
    %713 = vmatprep.subr.mxu0 %v59
    %714 = vmatpush1.msra.mxu0 %v58
    %715 = vmatprep.subr.mxu0 %v63
    %716 = vmatpush1.msra.mxu0 %v62
    %717 = vmatprep.subr.mxu0 %v67
    %718 = vmatpush1.msra.mxu0 %v66
    %719 = vmatprep.subr.mxu0 %v71
    %720 = vmatpush1.msra.mxu0 %v70
    %721 = vmatprep.subr.mxu0 %v75
    %722 = vmatpush1.msra.mxu0 %v74
    %723 = vmatprep.subr.mxu0 %v79
    %724 = vmatpush1.msra.mxu0 %v78
    %725 = vmatprep.subr.mxu0 %v83
    %726 = vmatpush1.msra.mxu0 %v82
    %727 = vmatprep.subr.mxu0 %v87
    %728 = vmatpush1.msra.mxu0 %v86
    %729 = vmatprep.subr.mxu0 %v91
    %730 = vmatpush1.msra.mxu0 %v90
    %731 = vmatprep.subr.mxu0 %v95
    %732 = vmatpush1.msra.mxu0 %v94
    %733 = vmatprep.subr.mxu0 %v99
    %734 = vmatpush1.msra.mxu0 %v98
    %735 = vmatprep.subr.mxu0 0.0
    %736 = vmatpush1.msra.mxu0 0.0
    %737 = vmatprep.subr.mxu0 0.0
    %738 = vmatpush1.msra.mxu0 0.0
    %739 = vmatprep.subr.mxu0 0.0
    %740 = vmatpush1.msra.mxu0 0.0
    %741 = vmatprep.subr.mxu0 0.0
    %742 = vmatpush1.msra.mxu0 0.0
    %743 = vmatprep.subr.mxu0 0.0
    %744 = vmatpush1.msra.mxu0 0.0
    %745 = vmatprep.subr.mxu0 0.0
    %746 = vmatpush1.msra.mxu0 0.0
    %747 = vmatprep.subr.mxu0 0.0
    %748 = vmatpush1.msra.mxu0 0.0
    %749 = vmatprep.subr.mxu0 0.0
    %750 = vmatpush1.msra.mxu0 0.0
    %751 = vmatprep.subr.mxu0 0.0
    %752 = vmatpush1.msra.mxu0 0.0
    %753 = vmatprep.subr.mxu0 0.0
    %754 = vmatpush1.msra.mxu0 0.0
    %755 = vmatprep.subr.mxu0 0.0
    %756 = vmatpush1.msra.mxu0 0.0
    %757 = vmatprep.subr.mxu0 0.0
    %758 = vmatpush1.msra.mxu0 0.0
    %759 = vmatprep.subr.mxu0 0.0
    %760 = vmatpush1.msra.mxu0 0.0
    %761 = vmatprep.subr.mxu0 0.0
    %762 = vmatpush1.msra.mxu0 0.0
    %763 = vmatprep.subr.mxu0 0.0
    %764 = vmatpush1.msra.mxu0 0.0
    %765 = vmatprep.subr.mxu0 0.0
    %766 = vmatpush1.msra.mxu0 0.0
    %767 = vmatprep.mubr.f32.mxu0 0.0
    %768 = vmatmul.mubr.f32.gmra.mrb[0].mxu0 %v699
    %v769 = vpop.f32.mrb[0].mxu0
    %v770 = vadd.f32 0.0, %v769
    %v771 = vpop.f32.mrb[0].mxu0
    %v772 = vadd.f32 0.0, %v771
    %773 = vdwg.mxu0
    %774 = vmatprep.subr.mxu0 %v41
    %775 = vmatpush1.msra.mxu0 %v40
    %776 = vmatprep.subr.mxu0 %v45
    %777 = vmatpush1.msra.mxu0 %v44
    %778 = vmatprep.subr.mxu0 %v49
    %779 = vmatpush1.msra.mxu0 %v48
    %780 = vmatprep.subr.mxu0 %v53
    %781 = vmatpush1.msra.mxu0 %v52
    %782 = vmatprep.subr.mxu0 %v57
    %783 = vmatpush1.msra.mxu0 %v56
    %784 = vmatprep.subr.mxu0 %v61
    %785 = vmatpush1.msra.mxu0 %v60
    %786 = vmatprep.subr.mxu0 %v65
    %787 = vmatpush1.msra.mxu0 %v64
    %788 = vmatprep.subr.mxu0 %v69
    %789 = vmatpush1.msra.mxu0 %v68
    %790 = vmatprep.subr.mxu0 %v73
    %791 = vmatpush1.msra.mxu0 %v72
    %792 = vmatprep.subr.mxu0 %v77
    %793 = vmatpush1.msra.mxu0 %v76
    %794 = vmatprep.subr.mxu0 %v81
    %795 = vmatpush1.msra.mxu0 %v80
    %796 = vmatprep.subr.mxu0 %v85
    %797 = vmatpush1.msra.mxu0 %v84
    %798 = vmatprep.subr.mxu0 %v89
    %799 = vmatpush1.msra.mxu0 %v88
    %800 = vmatprep.subr.mxu0 %v93
    %801 = vmatpush1.msra.mxu0 %v92
    %802 = vmatprep.subr.mxu0 %v97
    %803 = vmatpush1.msra.mxu0 %v96
    %804 = vmatprep.subr.mxu0 %v101
    %805 = vmatpush1.msra.mxu0 %v100
    %806 = vmatprep.subr.mxu0 0.0
    %807 = vmatpush1.msra.mxu0 0.0
    %808 = vmatprep.subr.mxu0 0.0
    %809 = vmatpush1.msra.mxu0 0.0
    %810 = vmatprep.subr.mxu0 0.0
    %811 = vmatpush1.msra.mxu0 0.0
    %812 = vmatprep.subr.mxu0 0.0
    %813 = vmatpush1.msra.mxu0 0.0
    %814 = vmatprep.subr.mxu0 0.0
    %815 = vmatpush1.msra.mxu0 0.0
    %816 = vmatprep.subr.mxu0 0.0
    %817 = vmatpush1.msra.mxu0 0.0
    %818 = vmatprep.subr.mxu0 0.0
    %819 = vmatpush1.msra.mxu0 0.0
    %820 = vmatprep.subr.mxu0 0.0
    %821 = vmatpush1.msra.mxu0 0.0
    %822 = vmatprep.subr.mxu0 0.0
    %823 = vmatpush1.msra.mxu0 0.0
    %824 = vmatprep.subr.mxu0 0.0
    %825 = vmatpush1.msra.mxu0 0.0
    %826 = vmatprep.subr.mxu0 0.0
    %827 = vmatpush1.msra.mxu0 0.0
    %828 = vmatprep.subr.mxu0 0.0
    %829 = vmatpush1.msra.mxu0 0.0
    %830 = vmatprep.subr.mxu0 0.0
    %831 = vmatpush1.msra.mxu0 0.0
    %832 = vmatprep.subr.mxu0 0.0
    %833 = vmatpush1.msra.mxu0 0.0
    %834 = vmatprep.subr.mxu0 0.0
    %835 = vmatpush1.msra.mxu0 0.0
    %836 = vmatprep.subr.mxu0 0.0
    %837 = vmatpush1.msra.mxu0 0.0
    %838 = vmatprep.mubr.f32.mxu0 0.0
    %839 = vmatmul.mubr.f32.gmra.mrb[0].mxu0 %v699
    %v840 = vpop.f32.mrb[0].mxu0
    %v841 = vadd.f32 0.0, %v840
    %v842 = vpop.f32.mrb[0].mxu0
    %v843 = vadd.f32 0.0, %v842
    %844 = vdwg.mxu0
    %v849 = vcombine.low %v770, %v772
    %v850 = vcombine.low %v841, %v843
    %v852 = vunpack.c.l.s4 1983009808
    %v853 = vunpack.c.0.s8 %v852
    %v854 = vlaneseq
    %v855 = vshrl.u32 %v854, 7
    %v856 = vsub.s32 %v853, %v855
    %v857 = vrot.slane %v849, %v856
    %v859 = vunpack.c.l.s4 1983009808
    %v860 = vunpack.c.0.s8 %v859
    %v861 = vlaneseq
    %v862 = vshrl.u32 %v861, 7
    %v863 = vsub.s32 %v860, %v862
    %v864 = vrot.slane %v850, %v863
    %v865 = vcombine.low %v857, %v864
    %v867 = vadd.f32 %v702, %v865
    %v868 = vxor.u32 %v867, 2147483648
    %v869 = vmul.f32 %v868, 1.442695
    %v870 = vpow.pop %v869
    %v871 = vadd.f32 %v870, 1.0
    %v872 = vrcp.pop %v871
    %v873 = vmul.f32 1.0, %v872
    %v875 = vrot.slane %v867, 2
    %v877 = vxor.u32 %v875, 2147483648
    %v878 = vmul.f32 %v877, 1.442695
    %v879 = vpow.pop %v878
    %v880 = vadd.f32 %v879, 1.0
    %v881 = vrcp.pop %v880
    %v882 = vmul.f32 1.0, %v881
    %v883 = vrot.slane %v867, 4
    %v885 = vtanh.pop %v883
    %v886 = vrot.slane %v867, 6
    %v888 = vxor.u32 %v886, 2147483648
    %v889 = vmul.f32 %v888, 1.442695
    %v890 = vpow.pop %v889
    %v891 = vadd.f32 %v890, 1.0
    %v892 = vrcp.pop %v891
    %v893 = vmul.f32 1.0, %v892
    %v894 = vmul.f32 %v882, %v697
    %v895 = vmul.f32 %v873, %v885
    %v896 = vadd.f32 %v894, %v895
    %v897 = vtanh.pop %v896
    %v898 = vmul.f32 %v893, %v897
    %s899 = scalar_lea.vmem %s0, 16
    %v900 = vld [vmem:[%s899] sm:$0xf]
    %v901 = vunpack.c.l.bf16 %v900
    %902 = vmatprep.subr.mxu0 %v39
    %903 = vmatpush1.msra.mxu0 %v38
    %904 = vmatprep.subr.mxu0 %v43
    %905 = vmatpush1.msra.mxu0 %v42
    %906 = vmatprep.subr.mxu0 %v47
    %907 = vmatpush1.msra.mxu0 %v46
    %908 = vmatprep.subr.mxu0 %v51
    %909 = vmatpush1.msra.mxu0 %v50
    %910 = vmatprep.subr.mxu0 %v55
    %911 = vmatpush1.msra.mxu0 %v54
    %912 = vmatprep.subr.mxu0 %v59
    %913 = vmatpush1.msra.mxu0 %v58
    %914 = vmatprep.subr.mxu0 %v63
    %915 = vmatpush1.msra.mxu0 %v62
    %916 = vmatprep.subr.mxu0 %v67
    %917 = vmatpush1.msra.mxu0 %v66
    %918 = vmatprep.subr.mxu0 %v71
    %919 = vmatpush1.msra.mxu0 %v70
    %920 = vmatprep.subr.mxu0 %v75
    %921 = vmatpush1.msra.mxu0 %v74
    %922 = vmatprep.subr.mxu0 %v79
    %923 = vmatpush1.msra.mxu0 %v78
    %924 = vmatprep.subr.mxu0 %v83
    %925 = vmatpush1.msra.mxu0 %v82
    %926 = vmatprep.subr.mxu0 %v87
    %927 = vmatpush1.msra.mxu0 %v86
    %928 = vmatprep.subr.mxu0 %v91
    %929 = vmatpush1.msra.mxu0 %v90
    %930 = vmatprep.subr.mxu0 %v95
    %931 = vmatpush1.msra.mxu0 %v94
    %932 = vmatprep.subr.mxu0 %v99
    %933 = vmatpush1.msra.mxu0 %v98
    %934 = vmatprep.subr.mxu0 0.0
    %935 = vmatpush1.msra.mxu0 0.0
    %936 = vmatprep.subr.mxu0 0.0
    %937 = vmatpush1.msra.mxu0 0.0
    %938 = vmatprep.subr.mxu0 0.0
    %939 = vmatpush1.msra.mxu0 0.0
    %940 = vmatprep.subr.mxu0 0.0
    %941 = vmatpush1.msra.mxu0 0.0
    %942 = vmatprep.subr.mxu0 0.0
    %943 = vmatpush1.msra.mxu0 0.0
    %944 = vmatprep.subr.mxu0 0.0
    %945 = vmatpush1.msra.mxu0 0.0
    %946 = vmatprep.subr.mxu0 0.0
    %947 = vmatpush1.msra.mxu0 0.0
    %948 = vmatprep.subr.mxu0 0.0
    %949 = vmatpush1.msra.mxu0 0.0
    %950 = vmatprep.subr.mxu0 0.0
    %951 = vmatpush1.msra.mxu0 0.0
    %952 = vmatprep.subr.mxu0 0.0
    %953 = vmatpush1.msra.mxu0 0.0
    %954 = vmatprep.subr.mxu0 0.0
    %955 = vmatpush1.msra.mxu0 0.0
    %956 = vmatprep.subr.mxu0 0.0
    %957 = vmatpush1.msra.mxu0 0.0
    %958 = vmatprep.subr.mxu0 0.0
    %959 = vmatpush1.msra.mxu0 0.0
    %960 = vmatprep.subr.mxu0 0.0
    %961 = vmatpush1.msra.mxu0 0.0
    %962 = vmatprep.subr.mxu0 0.0
    %963 = vmatpush1.msra.mxu0 0.0
    %964 = vmatprep.subr.mxu0 0.0
    %965 = vmatpush1.msra.mxu0 0.0
    %966 = vmatprep.mubr.f32.mxu0 0.0
    %967 = vmatmul.mubr.f32.gmra.mrb[0].mxu0 %v898
    %v968 = vpop.f32.mrb[0].mxu0
    %v969 = vadd.f32 0.0, %v968
    %v970 = vpop.f32.mrb[0].mxu0
    %v971 = vadd.f32 0.0, %v970
    %972 = vdwg.mxu0
    %973 = vmatprep.subr.mxu0 %v41
    %974 = vmatpush1.msra.mxu0 %v40
    %975 = vmatprep.subr.mxu0 %v45
    %976 = vmatpush1.msra.mxu0 %v44
    %977 = vmatprep.subr.mxu0 %v49
    %978 = vmatpush1.msra.mxu0 %v48
    %979 = vmatprep.subr.mxu0 %v53
    %980 = vmatpush1.msra.mxu0 %v52
    %981 = vmatprep.subr.mxu0 %v57
    %982 = vmatpush1.msra.mxu0 %v56
    %983 = vmatprep.subr.mxu0 %v61
    %984 = vmatpush1.msra.mxu0 %v60
    %985 = vmatprep.subr.mxu0 %v65
    %986 = vmatpush1.msra.mxu0 %v64
    %987 = vmatprep.subr.mxu0 %v69
    %988 = vmatpush1.msra.mxu0 %v68
    %989 = vmatprep.subr.mxu0 %v73
    %990 = vmatpush1.msra.mxu0 %v72
    %991 = vmatprep.subr.mxu0 %v77
    %992 = vmatpush1.msra.mxu0 %v76
    %993 = vmatprep.subr.mxu0 %v81
    %994 = vmatpush1.msra.mxu0 %v80
    %995 = vmatprep.subr.mxu0 %v85
    %996 = vmatpush1.msra.mxu0 %v84
    %997 = vmatprep.subr.mxu0 %v89
    %998 = vmatpush1.msra.mxu0 %v88
    %999 = vmatprep.subr.mxu0 %v93
    %1000 = vmatpush1.msra.mxu0 %v92
    %1001 = vmatprep.subr.mxu0 %v97
    %1002 = vmatpush1.msra.mxu0 %v96
    %1003 = vmatprep.subr.mxu0 %v101
    %1004 = vmatpush1.msra.mxu0 %v100
    %1005 = vmatprep.subr.mxu0 0.0
    %1006 = vmatpush1.msra.mxu0 0.0
    %1007 = vmatprep.subr.mxu0 0.0
    %1008 = vmatpush1.msra.mxu0 0.0
    %1009 = vmatprep.subr.mxu0 0.0
    %1010 = vmatpush1.msra.mxu0 0.0
    %1011 = vmatprep.subr.mxu0 0.0
    %1012 = vmatpush1.msra.mxu0 0.0
    %1013 = vmatprep.subr.mxu0 0.0
    %1014 = vmatpush1.msra.mxu0 0.0
    %1015 = vmatprep.subr.mxu0 0.0
    %1016 = vmatpush1.msra.mxu0 0.0
    %1017 = vmatprep.subr.mxu0 0.0
    %1018 = vmatpush1.msra.mxu0 0.0
    %1019 = vmatprep.subr.mxu0 0.0
    %1020 = vmatpush1.msra.mxu0 0.0
    %1021 = vmatprep.subr.mxu0 0.0
    %1022 = vmatpush1.msra.mxu0 0.0
    %1023 = vmatprep.subr.mxu0 0.0
    %1024 = vmatpush1.msra.mxu0 0.0
    %1025 = vmatprep.subr.mxu0 0.0
    %1026 = vmatpush1.msra.mxu0 0.0
    %1027 = vmatprep.subr.mxu0 0.0
    %1028 = vmatpush1.msra.mxu0 0.0
    %1029 = vmatprep.subr.mxu0 0.0
    %1030 = vmatpush1.msra.mxu0 0.0
    %1031 = vmatprep.subr.mxu0 0.0
    %1032 = vmatpush1.msra.mxu0 0.0
    %1033 = vmatprep.subr.mxu0 0.0
    %1034 = vmatpush1.msra.mxu0 0.0
    %1035 = vmatprep.subr.mxu0 0.0
    %1036 = vmatpush1.msra.mxu0 0.0
    %1037 = vmatprep.mubr.f32.mxu0 0.0
    %1038 = vmatmul.mubr.f32.gmra.mrb[0].mxu0 %v898
    %v1039 = vpop.f32.mrb[0].mxu0
    %v1040 = vadd.f32 0.0, %v1039
    %v1041 = vpop.f32.mrb[0].mxu0
    %v1042 = vadd.f32 0.0, %v1041
    %1043 = vdwg.mxu0
    %v1048 = vcombine.low %v969, %v971
    %v1049 = vcombine.low %v1040, %v1042
    %v1051 = vunpack.c.l.s4 1983009808
    %v1052 = vunpack.c.0.s8 %v1051
    %v1053 = vlaneseq
    %v1054 = vshrl.u32 %v1053, 7
    %v1055 = vsub.s32 %v1052, %v1054
    %v1056 = vrot.slane %v1048, %v1055
    %v1058 = vunpack.c.l.s4 1983009808
    %v1059 = vunpack.c.0.s8 %v1058
    %v1060 = vlaneseq
    %v1061 = vshrl.u32 %v1060, 7
    %v1062 = vsub.s32 %v1059, %v1061
    %v1063 = vrot.slane %v1049, %v1062
    %v1064 = vcombine.low %v1056, %v1063
    %v1066 = vadd.f32 %v901, %v1064
    %v1067 = vxor.u32 %v1066, 2147483648
    %v1068 = vmul.f32 %v1067, 1.442695
    %v1069 = vpow.pop %v1068
    %v1070 = vadd.f32 %v1069, 1.0
    %v1071 = vrcp.pop %v1070
    %v1072 = vmul.f32 1.0, %v1071
    %v1074 = vrot.slane %v1066, 2
    %v1076 = vxor.u32 %v1074, 2147483648
    %v1077 = vmul.f32 %v1076, 1.442695
    %v1078 = vpow.pop %v1077
    %v1079 = vadd.f32 %v1078, 1.0
    %v1080 = vrcp.pop %v1079
    %v1081 = vmul.f32 1.0, %v1080
    %v1082 = vrot.slane %v1066, 4
    %v1084 = vtanh.pop %v1082
    %v1085 = vrot.slane %v1066, 6
    %v1087 = vxor.u32 %v1085, 2147483648
    %v1088 = vmul.f32 %v1087, 1.442695
    %v1089 = vpow.pop %v1088
    %v1090 = vadd.f32 %v1089, 1.0
    %v1091 = vrcp.pop %v1090
    %v1092 = vmul.f32 1.0, %v1091
    %v1093 = vmul.f32 %v1081, %v896
    %v1094 = vmul.f32 %v1072, %v1084
    %v1095 = vadd.f32 %v1093, %v1094
    %v1096 = vtanh.pop %v1095
    %v1097 = vmul.f32 %v1092, %v1096
    %s1098 = scalar_lea.vmem %s0, 20
    %v1099 = vld [vmem:[%s1098] sm:$0xf]
    %v1100 = vunpack.c.l.bf16 %v1099
    %1101 = vmatprep.subr.mxu0 %v39
    %1102 = vmatpush1.msra.mxu0 %v38
    %1103 = vmatprep.subr.mxu0 %v43
    %1104 = vmatpush1.msra.mxu0 %v42
    %1105 = vmatprep.subr.mxu0 %v47
    %1106 = vmatpush1.msra.mxu0 %v46
    %1107 = vmatprep.subr.mxu0 %v51
    %1108 = vmatpush1.msra.mxu0 %v50
    %1109 = vmatprep.subr.mxu0 %v55
    %1110 = vmatpush1.msra.mxu0 %v54
    %1111 = vmatprep.subr.mxu0 %v59
    %1112 = vmatpush1.msra.mxu0 %v58
    %1113 = vmatprep.subr.mxu0 %v63
    %1114 = vmatpush1.msra.mxu0 %v62
    %1115 = vmatprep.subr.mxu0 %v67
    %1116 = vmatpush1.msra.mxu0 %v66
    %1117 = vmatprep.subr.mxu0 %v71
    %1118 = vmatpush1.msra.mxu0 %v70
    %1119 = vmatprep.subr.mxu0 %v75
    %1120 = vmatpush1.msra.mxu0 %v74
    %1121 = vmatprep.subr.mxu0 %v79
    %1122 = vmatpush1.msra.mxu0 %v78
    %1123 = vmatprep.subr.mxu0 %v83
    %1124 = vmatpush1.msra.mxu0 %v82
    %1125 = vmatprep.subr.mxu0 %v87
    %1126 = vmatpush1.msra.mxu0 %v86
    %1127 = vmatprep.subr.mxu0 %v91
    %1128 = vmatpush1.msra.mxu0 %v90
    %1129 = vmatprep.subr.mxu0 %v95
    %1130 = vmatpush1.msra.mxu0 %v94
    %1131 = vmatprep.subr.mxu0 %v99
    %1132 = vmatpush1.msra.mxu0 %v98
    %1133 = vmatprep.subr.mxu0 0.0
    %1134 = vmatpush1.msra.mxu0 0.0
    %1135 = vmatprep.subr.mxu0 0.0
    %1136 = vmatpush1.msra.mxu0 0.0
    %1137 = vmatprep.subr.mxu0 0.0
    %1138 = vmatpush1.msra.mxu0 0.0
    %1139 = vmatprep.subr.mxu0 0.0
    %1140 = vmatpush1.msra.mxu0 0.0
    %1141 = vmatprep.subr.mxu0 0.0
    %1142 = vmatpush1.msra.mxu0 0.0
    %1143 = vmatprep.subr.mxu0 0.0
    %1144 = vmatpush1.msra.mxu0 0.0
    %1145 = vmatprep.subr.mxu0 0.0
    %1146 = vmatpush1.msra.mxu0 0.0
    %1147 = vmatprep.subr.mxu0 0.0
    %1148 = vmatpush1.msra.mxu0 0.0
    %1149 = vmatprep.subr.mxu0 0.0
    %1150 = vmatpush1.msra.mxu0 0.0
    %1151 = vmatprep.subr.mxu0 0.0
    %1152 = vmatpush1.msra.mxu0 0.0
    %1153 = vmatprep.subr.mxu0 0.0
    %1154 = vmatpush1.msra.mxu0 0.0
    %1155 = vmatprep.subr.mxu0 0.0
    %1156 = vmatpush1.msra.mxu0 0.0
    %1157 = vmatprep.subr.mxu0 0.0
    %1158 = vmatpush1.msra.mxu0 0.0
    %1159 = vmatprep.subr.mxu0 0.0
    %1160 = vmatpush1.msra.mxu0 0.0
    %1161 = vmatprep.subr.mxu0 0.0
    %1162 = vmatpush1.msra.mxu0 0.0
    %1163 = vmatprep.subr.mxu0 0.0
    %1164 = vmatpush1.msra.mxu0 0.0
    %1165 = vmatprep.mubr.f32.mxu0 0.0
    %1166 = vmatmul.mubr.f32.gmra.mrb[0].mxu0 %v1097
    %v1167 = vpop.f32.mrb[0].mxu0
    %v1168 = vadd.f32 0.0, %v1167
    %v1169 = vpop.f32.mrb[0].mxu0
    %v1170 = vadd.f32 0.0, %v1169
    %1171 = vdwg.mxu0
    %1172 = vmatprep.subr.mxu0 %v41
    %1173 = vmatpush1.msra.mxu0 %v40
    %1174 = vmatprep.subr.mxu0 %v45
    %1175 = vmatpush1.msra.mxu0 %v44
    %1176 = vmatprep.subr.mxu0 %v49
    %1177 = vmatpush1.msra.mxu0 %v48
    %1178 = vmatprep.subr.mxu0 %v53
    %1179 = vmatpush1.msra.mxu0 %v52
    %1180 = vmatprep.subr.mxu0 %v57
    %1181 = vmatpush1.msra.mxu0 %v56
    %1182 = vmatprep.subr.mxu0 %v61
    %1183 = vmatpush1.msra.mxu0 %v60
    %1184 = vmatprep.subr.mxu0 %v65
    %1185 = vmatpush1.msra.mxu0 %v64
    %1186 = vmatprep.subr.mxu0 %v69
    %1187 = vmatpush1.msra.mxu0 %v68
    %1188 = vmatprep.subr.mxu0 %v73
    %1189 = vmatpush1.msra.mxu0 %v72
    %1190 = vmatprep.subr.mxu0 %v77
    %1191 = vmatpush1.msra.mxu0 %v76
    %1192 = vmatprep.subr.mxu0 %v81
    %1193 = vmatpush1.msra.mxu0 %v80
    %1194 = vmatprep.subr.mxu0 %v85
    %1195 = vmatpush1.msra.mxu0 %v84
    %1196 = vmatprep.subr.mxu0 %v89
    %1197 = vmatpush1.msra.mxu0 %v88
    %1198 = vmatprep.subr.mxu0 %v93
    %1199 = vmatpush1.msra.mxu0 %v92
    %1200 = vmatprep.subr.mxu0 %v97
    %1201 = vmatpush1.msra.mxu0 %v96
    %1202 = vmatprep.subr.mxu0 %v101
    %1203 = vmatpush1.msra.mxu0 %v100
    %1204 = vmatprep.subr.mxu0 0.0
    %1205 = vmatpush1.msra.mxu0 0.0
    %1206 = vmatprep.subr.mxu0 0.0
    %1207 = vmatpush1.msra.mxu0 0.0
    %1208 = vmatprep.subr.mxu0 0.0
    %1209 = vmatpush1.msra.mxu0 0.0
    %1210 = vmatprep.subr.mxu0 0.0
    %1211 = vmatpush1.msra.mxu0 0.0
    %1212 = vmatprep.subr.mxu0 0.0
    %1213 = vmatpush1.msra.mxu0 0.0
    %1214 = vmatprep.subr.mxu0 0.0
    %1215 = vmatpush1.msra.mxu0 0.0
    %1216 = vmatprep.subr.mxu0 0.0
    %1217 = vmatpush1.msra.mxu0 0.0
    %1218 = vmatprep.subr.mxu0 0.0
    %1219 = vmatpush1.msra.mxu0 0.0
    %1220 = vmatprep.subr.mxu0 0.0
    %1221 = vmatpush1.msra.mxu0 0.0
    %1222 = vmatprep.subr.mxu0 0.0
    %1223 = vmatpush1.msra.mxu0 0.0
    %1224 = vmatprep.subr.mxu0 0.0
    %1225 = vmatpush1.msra.mxu0 0.0
    %1226 = vmatprep.subr.mxu0 0.0
    %1227 = vmatpush1.msra.mxu0 0.0
    %1228 = vmatprep.subr.mxu0 0.0
    %1229 = vmatpush1.msra.mxu0 0.0
    %1230 = vmatprep.subr.mxu0 0.0
    %1231 = vmatpush1.msra.mxu0 0.0
    %1232 = vmatprep.subr.mxu0 0.0
    %1233 = vmatpush1.msra.mxu0 0.0
    %1234 = vmatprep.subr.mxu0 0.0
    %1235 = vmatpush1.msra.mxu0 0.0
    %1236 = vmatprep.mubr.f32.mxu0 0.0
    %1237 = vmatmul.mubr.f32.gmra.mrb[0].mxu0 %v1097
    %v1238 = vpop.f32.mrb[0].mxu0
    %v1239 = vadd.f32 0.0, %v1238
    %v1240 = vpop.f32.mrb[0].mxu0
    %v1241 = vadd.f32 0.0, %v1240
    %1242 = vdwg.mxu0
    %v1247 = vcombine.low %v1168, %v1170
    %v1248 = vcombine.low %v1239, %v1241
    %v1250 = vunpack.c.l.s4 1983009808
    %v1251 = vunpack.c.0.s8 %v1250
    %v1252 = vlaneseq
    %v1253 = vshrl.u32 %v1252, 7
    %v1254 = vsub.s32 %v1251, %v1253
    %v1255 = vrot.slane %v1247, %v1254
    %v1257 = vunpack.c.l.s4 1983009808
    %v1258 = vunpack.c.0.s8 %v1257
    %v1259 = vlaneseq
    %v1260 = vshrl.u32 %v1259, 7
    %v1261 = vsub.s32 %v1258, %v1260
    %v1262 = vrot.slane %v1248, %v1261
    %v1263 = vcombine.low %v1255, %v1262
    %v1265 = vadd.f32 %v1100, %v1263
    %v1266 = vxor.u32 %v1265, 2147483648
    %v1267 = vmul.f32 %v1266, 1.442695
    %v1268 = vpow.pop %v1267
    %v1269 = vadd.f32 %v1268, 1.0
    %v1270 = vrcp.pop %v1269
    %v1271 = vmul.f32 1.0, %v1270
    %v1273 = vrot.slane %v1265, 2
    %v1275 = vxor.u32 %v1273, 2147483648
    %v1276 = vmul.f32 %v1275, 1.442695
    %v1277 = vpow.pop %v1276
    %v1278 = vadd.f32 %v1277, 1.0
    %v1279 = vrcp.pop %v1278
    %v1280 = vmul.f32 1.0, %v1279
    %v1281 = vrot.slane %v1265, 4
    %v1283 = vtanh.pop %v1281
    %v1284 = vrot.slane %v1265, 6
    %v1286 = vxor.u32 %v1284, 2147483648
    %v1287 = vmul.f32 %v1286, 1.442695
    %v1288 = vpow.pop %v1287
    %v1289 = vadd.f32 %v1288, 1.0
    %v1290 = vrcp.pop %v1289
    %v1291 = vmul.f32 1.0, %v1290
    %v1292 = vmul.f32 %v1280, %v1095
    %v1293 = vmul.f32 %v1271, %v1283
    %v1294 = vadd.f32 %v1292, %v1293
    %v1295 = vtanh.pop %v1294
    %v1296 = vmul.f32 %v1291, %v1295
    %s1297 = scalar_lea.vmem %s0, 24
    %v1298 = vld [vmem:[%s1297] sm:$0xf]
    %v1299 = vunpack.c.l.bf16 %v1298
    %1300 = vmatprep.subr.mxu0 %v39
    %1301 = vmatpush1.msra.mxu0 %v38
    %1302 = vmatprep.subr.mxu0 %v43
    %1303 = vmatpush1.msra.mxu0 %v42
    %1304 = vmatprep.subr.mxu0 %v47
    %1305 = vmatpush1.msra.mxu0 %v46
    %1306 = vmatprep.subr.mxu0 %v51
    %1307 = vmatpush1.msra.mxu0 %v50
    %1308 = vmatprep.subr.mxu0 %v55
    %1309 = vmatpush1.msra.mxu0 %v54
    %1310 = vmatprep.subr.mxu0 %v59
    %1311 = vmatpush1.msra.mxu0 %v58
    %1312 = vmatprep.subr.mxu0 %v63
    %1313 = vmatpush1.msra.mxu0 %v62
    %1314 = vmatprep.subr.mxu0 %v67
    %1315 = vmatpush1.msra.mxu0 %v66
    %1316 = vmatprep.subr.mxu0 %v71
    %1317 = vmatpush1.msra.mxu0 %v70
    %1318 = vmatprep.subr.mxu0 %v75
    %1319 = vmatpush1.msra.mxu0 %v74
    %1320 = vmatprep.subr.mxu0 %v79
    %1321 = vmatpush1.msra.mxu0 %v78
    %1322 = vmatprep.subr.mxu0 %v83
    %1323 = vmatpush1.msra.mxu0 %v82
    %1324 = vmatprep.subr.mxu0 %v87
    %1325 = vmatpush1.msra.mxu0 %v86
    %1326 = vmatprep.subr.mxu0 %v91
    %1327 = vmatpush1.msra.mxu0 %v90
    %1328 = vmatprep.subr.mxu0 %v95
    %1329 = vmatpush1.msra.mxu0 %v94
    %1330 = vmatprep.subr.mxu0 %v99
    %1331 = vmatpush1.msra.mxu0 %v98
    %1332 = vmatprep.subr.mxu0 0.0
    %1333 = vmatpush1.msra.mxu0 0.0
    %1334 = vmatprep.subr.mxu0 0.0
    %1335 = vmatpush1.msra.mxu0 0.0
    %1336 = vmatprep.subr.mxu0 0.0
    %1337 = vmatpush1.msra.mxu0 0.0
    %1338 = vmatprep.subr.mxu0 0.0
    %1339 = vmatpush1.msra.mxu0 0.0
    %1340 = vmatprep.subr.mxu0 0.0
    %1341 = vmatpush1.msra.mxu0 0.0
    %1342 = vmatprep.subr.mxu0 0.0
    %1343 = vmatpush1.msra.mxu0 0.0
    %1344 = vmatprep.subr.mxu0 0.0
    %1345 = vmatpush1.msra.mxu0 0.0
    %1346 = vmatprep.subr.mxu0 0.0
    %1347 = vmatpush1.msra.mxu0 0.0
    %1348 = vmatprep.subr.mxu0 0.0
    %1349 = vmatpush1.msra.mxu0 0.0
    %1350 = vmatprep.subr.mxu0 0.0
    %1351 = vmatpush1.msra.mxu0 0.0
    %1352 = vmatprep.subr.mxu0 0.0
    %1353 = vmatpush1.msra.mxu0 0.0
    %1354 = vmatprep.subr.mxu0 0.0
    %1355 = vmatpush1.msra.mxu0 0.0
    %1356 = vmatprep.subr.mxu0 0.0
    %1357 = vmatpush1.msra.mxu0 0.0
    %1358 = vmatprep.subr.mxu0 0.0
    %1359 = vmatpush1.msra.mxu0 0.0
    %1360 = vmatprep.subr.mxu0 0.0
    %1361 = vmatpush1.msra.mxu0 0.0
    %1362 = vmatprep.subr.mxu0 0.0
    %1363 = vmatpush1.msra.mxu0 0.0
    %1364 = vmatprep.mubr.f32.mxu0 0.0
    %1365 = vmatmul.mubr.f32.gmra.mrb[0].mxu0 %v1296
    %v1366 = vpop.f32.mrb[0].mxu0
    %v1367 = vadd.f32 0.0, %v1366
    %v1368 = vpop.f32.mrb[0].mxu0
    %v1369 = vadd.f32 0.0, %v1368
    %1370 = vdwg.mxu0
    %1371 = vmatprep.subr.mxu0 %v41
    %1372 = vmatpush1.msra.mxu0 %v40
    %1373 = vmatprep.subr.mxu0 %v45
    %1374 = vmatpush1.msra.mxu0 %v44
    %1375 = vmatprep.subr.mxu0 %v49
    %1376 = vmatpush1.msra.mxu0 %v48
    %1377 = vmatprep.subr.mxu0 %v53
    %1378 = vmatpush1.msra.mxu0 %v52
    %1379 = vmatprep.subr.mxu0 %v57
    %1380 = vmatpush1.msra.mxu0 %v56
    %1381 = vmatprep.subr.mxu0 %v61
    %1382 = vmatpush1.msra.mxu0 %v60
    %1383 = vmatprep.subr.mxu0 %v65
    %1384 = vmatpush1.msra.mxu0 %v64
    %1385 = vmatprep.subr.mxu0 %v69
    %1386 = vmatpush1.msra.mxu0 %v68
    %1387 = vmatprep.subr.mxu0 %v73
    %1388 = vmatpush1.msra.mxu0 %v72
    %1389 = vmatprep.subr.mxu0 %v77
    %1390 = vmatpush1.msra.mxu0 %v76
    %1391 = vmatprep.subr.mxu0 %v81
    %1392 = vmatpush1.msra.mxu0 %v80
    %1393 = vmatprep.subr.mxu0 %v85
    %1394 = vmatpush1.msra.mxu0 %v84
    %1395 = vmatprep.subr.mxu0 %v89
    %1396 = vmatpush1.msra.mxu0 %v88
    %1397 = vmatprep.subr.mxu0 %v93
    %1398 = vmatpush1.msra.mxu0 %v92
    %1399 = vmatprep.subr.mxu0 %v97
    %1400 = vmatpush1.msra.mxu0 %v96
    %1401 = vmatprep.subr.mxu0 %v101
    %1402 = vmatpush1.msra.mxu0 %v100
    %1403 = vmatprep.subr.mxu0 0.0
    %1404 = vmatpush1.msra.mxu0 0.0
    %1405 = vmatprep.subr.mxu0 0.0
    %1406 = vmatpush1.msra.mxu0 0.0
    %1407 = vmatprep.subr.mxu0 0.0
    %1408 = vmatpush1.msra.mxu0 0.0
    %1409 = vmatprep.subr.mxu0 0.0
    %1410 = vmatpush1.msra.mxu0 0.0
    %1411 = vmatprep.subr.mxu0 0.0
    %1412 = vmatpush1.msra.mxu0 0.0
    %1413 = vmatprep.subr.mxu0 0.0
    %1414 = vmatpush1.msra.mxu0 0.0
    %1415 = vmatprep.subr.mxu0 0.0
    %1416 = vmatpush1.msra.mxu0 0.0
    %1417 = vmatprep.subr.mxu0 0.0
    %1418 = vmatpush1.msra.mxu0 0.0
    %1419 = vmatprep.subr.mxu0 0.0
    %1420 = vmatpush1.msra.mxu0 0.0
    %1421 = vmatprep.subr.mxu0 0.0
    %1422 = vmatpush1.msra.mxu0 0.0
    %1423 = vmatprep.subr.mxu0 0.0
    %1424 = vmatpush1.msra.mxu0 0.0
    %1425 = vmatprep.subr.mxu0 0.0
    %1426 = vmatpush1.msra.mxu0 0.0
    %1427 = vmatprep.subr.mxu0 0.0
    %1428 = vmatpush1.msra.mxu0 0.0
    %1429 = vmatprep.subr.mxu0 0.0
    %1430 = vmatpush1.msra.mxu0 0.0
    %1431 = vmatprep.subr.mxu0 0.0
    %1432 = vmatpush1.msra.mxu0 0.0
    %1433 = vmatprep.subr.mxu0 0.0
    %1434 = vmatpush1.msra.mxu0 0.0
    %1435 = vmatprep.mubr.f32.mxu0 0.0
    %1436 = vmatmul.mubr.f32.gmra.mrb[0].mxu0 %v1296
    %v1437 = vpop.f32.mrb[0].mxu0
    %v1438 = vadd.f32 0.0, %v1437
    %v1439 = vpop.f32.mrb[0].mxu0
    %v1440 = vadd.f32 0.0, %v1439
    %1441 = vdwg.mxu0
    %v1446 = vcombine.low %v1367, %v1369
    %v1447 = vcombine.low %v1438, %v1440
    %v1449 = vunpack.c.l.s4 1983009808
    %v1450 = vunpack.c.0.s8 %v1449
    %v1451 = vlaneseq
    %v1452 = vshrl.u32 %v1451, 7
    %v1453 = vsub.s32 %v1450, %v1452
    %v1454 = vrot.slane %v1446, %v1453
    %v1456 = vunpack.c.l.s4 1983009808
    %v1457 = vunpack.c.0.s8 %v1456
    %v1458 = vlaneseq
    %v1459 = vshrl.u32 %v1458, 7
    %v1460 = vsub.s32 %v1457, %v1459
    %v1461 = vrot.slane %v1447, %v1460
    %v1462 = vcombine.low %v1454, %v1461
    %v1464 = vadd.f32 %v1299, %v1462
    %v1465 = vxor.u32 %v1464, 2147483648
    %v1466 = vmul.f32 %v1465, 1.442695
    %v1467 = vpow.pop %v1466
    %v1468 = vadd.f32 %v1467, 1.0
    %v1469 = vrcp.pop %v1468
    %v1470 = vmul.f32 1.0, %v1469
    %v1472 = vrot.slane %v1464, 2
    %v1474 = vxor.u32 %v1472, 2147483648
    %v1475 = vmul.f32 %v1474, 1.442695
    %v1476 = vpow.pop %v1475
    %v1477 = vadd.f32 %v1476, 1.0
    %v1478 = vrcp.pop %v1477
    %v1479 = vmul.f32 1.0, %v1478
    %v1480 = vrot.slane %v1464, 4
    %v1482 = vtanh.pop %v1480
    %v1483 = vrot.slane %v1464, 6
    %v1485 = vxor.u32 %v1483, 2147483648
    %v1486 = vmul.f32 %v1485, 1.442695
    %v1487 = vpow.pop %v1486
    %v1488 = vadd.f32 %v1487, 1.0
    %v1489 = vrcp.pop %v1488
    %v1490 = vmul.f32 1.0, %v1489
    %v1491 = vmul.f32 %v1479, %v1294
    %v1492 = vmul.f32 %v1470, %v1482
    %v1493 = vadd.f32 %v1491, %v1492
    %v1494 = vtanh.pop %v1493
    %v1495 = vmul.f32 %v1490, %v1494
    %s1496 = scalar_lea.vmem %s0, 28
    %v1497 = vld [vmem:[%s1496] sm:$0xf]
    %v1498 = vunpack.c.l.bf16 %v1497
    %1499 = vmatprep.subr.mxu0 %v39
    %1500 = vmatpush1.msra.mxu0 %v38
    %1501 = vmatprep.subr.mxu0 %v43
    %1502 = vmatpush1.msra.mxu0 %v42
    %1503 = vmatprep.subr.mxu0 %v47
    %1504 = vmatpush1.msra.mxu0 %v46
    %1505 = vmatprep.subr.mxu0 %v51
    %1506 = vmatpush1.msra.mxu0 %v50
    %1507 = vmatprep.subr.mxu0 %v55
    %1508 = vmatpush1.msra.mxu0 %v54
    %1509 = vmatprep.subr.mxu0 %v59
    %1510 = vmatpush1.msra.mxu0 %v58
    %1511 = vmatprep.subr.mxu0 %v63
    %1512 = vmatpush1.msra.mxu0 %v62
    %1513 = vmatprep.subr.mxu0 %v67
    %1514 = vmatpush1.msra.mxu0 %v66
    %1515 = vmatprep.subr.mxu0 %v71
    %1516 = vmatpush1.msra.mxu0 %v70
    %1517 = vmatprep.subr.mxu0 %v75
    %1518 = vmatpush1.msra.mxu0 %v74
    %1519 = vmatprep.subr.mxu0 %v79
    %1520 = vmatpush1.msra.mxu0 %v78
    %1521 = vmatprep.subr.mxu0 %v83
    %1522 = vmatpush1.msra.mxu0 %v82
    %1523 = vmatprep.subr.mxu0 %v87
    %1524 = vmatpush1.msra.mxu0 %v86
    %1525 = vmatprep.subr.mxu0 %v91
    %1526 = vmatpush1.msra.mxu0 %v90
    %1527 = vmatprep.subr.mxu0 %v95
    %1528 = vmatpush1.msra.mxu0 %v94
    %1529 = vmatprep.subr.mxu0 %v99
    %1530 = vmatpush1.msra.mxu0 %v98
    %1531 = vmatprep.subr.mxu0 0.0
    %1532 = vmatpush1.msra.mxu0 0.0
    %1533 = vmatprep.subr.mxu0 0.0
    %1534 = vmatpush1.msra.mxu0 0.0
    %1535 = vmatprep.subr.mxu0 0.0
    %1536 = vmatpush1.msra.mxu0 0.0
    %1537 = vmatprep.subr.mxu0 0.0
    %1538 = vmatpush1.msra.mxu0 0.0
    %1539 = vmatprep.subr.mxu0 0.0
    %1540 = vmatpush1.msra.mxu0 0.0
    %1541 = vmatprep.subr.mxu0 0.0
    %1542 = vmatpush1.msra.mxu0 0.0
    %1543 = vmatprep.subr.mxu0 0.0
    %1544 = vmatpush1.msra.mxu0 0.0
    %1545 = vmatprep.subr.mxu0 0.0
    %1546 = vmatpush1.msra.mxu0 0.0
    %1547 = vmatprep.subr.mxu0 0.0
    %1548 = vmatpush1.msra.mxu0 0.0
    %1549 = vmatprep.subr.mxu0 0.0
    %1550 = vmatpush1.msra.mxu0 0.0
    %1551 = vmatprep.subr.mxu0 0.0
    %1552 = vmatpush1.msra.mxu0 0.0
    %1553 = vmatprep.subr.mxu0 0.0
    %1554 = vmatpush1.msra.mxu0 0.0
    %1555 = vmatprep.subr.mxu0 0.0
    %1556 = vmatpush1.msra.mxu0 0.0
    %1557 = vmatprep.subr.mxu0 0.0
    %1558 = vmatpush1.msra.mxu0 0.0
    %1559 = vmatprep.subr.mxu0 0.0
    %1560 = vmatpush1.msra.mxu0 0.0
    %1561 = vmatprep.subr.mxu0 0.0
    %1562 = vmatpush1.msra.mxu0 0.0
    %1563 = vmatprep.mubr.f32.mxu0 0.0
    %1564 = vmatmul.mubr.f32.gmra.mrb[0].mxu0 %v1495
    %v1565 = vpop.f32.mrb[0].mxu0
    %v1566 = vadd.f32 0.0, %v1565
    %v1567 = vpop.f32.mrb[0].mxu0
    %v1568 = vadd.f32 0.0, %v1567
    %1569 = vdwg.mxu0
    %1570 = vmatprep.subr.mxu0 %v41
    %1571 = vmatpush1.msra.mxu0 %v40
    %1572 = vmatprep.subr.mxu0 %v45
    %1573 = vmatpush1.msra.mxu0 %v44
    %1574 = vmatprep.subr.mxu0 %v49
    %1575 = vmatpush1.msra.mxu0 %v48
    %1576 = vmatprep.subr.mxu0 %v53
    %1577 = vmatpush1.msra.mxu0 %v52
    %1578 = vmatprep.subr.mxu0 %v57
    %1579 = vmatpush1.msra.mxu0 %v56
    %1580 = vmatprep.subr.mxu0 %v61
    %1581 = vmatpush1.msra.mxu0 %v60
    %1582 = vmatprep.subr.mxu0 %v65
    %1583 = vmatpush1.msra.mxu0 %v64
    %1584 = vmatprep.subr.mxu0 %v69
    %1585 = vmatpush1.msra.mxu0 %v68
    %1586 = vmatprep.subr.mxu0 %v73
    %1587 = vmatpush1.msra.mxu0 %v72
    %1588 = vmatprep.subr.mxu0 %v77
    %1589 = vmatpush1.msra.mxu0 %v76
    %1590 = vmatprep.subr.mxu0 %v81
    %1591 = vmatpush1.msra.mxu0 %v80
    %1592 = vmatprep.subr.mxu0 %v85
    %1593 = vmatpush1.msra.mxu0 %v84
    %1594 = vmatprep.subr.mxu0 %v89
    %1595 = vmatpush1.msra.mxu0 %v88
    %1596 = vmatprep.subr.mxu0 %v93
    %1597 = vmatpush1.msra.mxu0 %v92
    %1598 = vmatprep.subr.mxu0 %v97
    %1599 = vmatpush1.msra.mxu0 %v96
    %1600 = vmatprep.subr.mxu0 %v101
    %1601 = vmatpush1.msra.mxu0 %v100
    %1602 = vmatprep.subr.mxu0 0.0
    %1603 = vmatpush1.msra.mxu0 0.0
    %1604 = vmatprep.subr.mxu0 0.0
    %1605 = vmatpush1.msra.mxu0 0.0
    %1606 = vmatprep.subr.mxu0 0.0
    %1607 = vmatpush1.msra.mxu0 0.0
    %1608 = vmatprep.subr.mxu0 0.0
    %1609 = vmatpush1.msra.mxu0 0.0
    %1610 = vmatprep.subr.mxu0 0.0
    %1611 = vmatpush1.msra.mxu0 0.0
    %1612 = vmatprep.subr.mxu0 0.0
    %1613 = vmatpush1.msra.mxu0 0.0
    %1614 = vmatprep.subr.mxu0 0.0
    %1615 = vmatpush1.msra.mxu0 0.0
    %1616 = vmatprep.subr.mxu0 0.0
    %1617 = vmatpush1.msra.mxu0 0.0
    %1618 = vmatprep.subr.mxu0 0.0
    %1619 = vmatpush1.msra.mxu0 0.0
    %1620 = vmatprep.subr.mxu0 0.0
    %1621 = vmatpush1.msra.mxu0 0.0
    %1622 = vmatprep.subr.mxu0 0.0
    %1623 = vmatpush1.msra.mxu0 0.0
    %1624 = vmatprep.subr.mxu0 0.0
    %1625 = vmatpush1.msra.mxu0 0.0
    %1626 = vmatprep.subr.mxu0 0.0
    %1627 = vmatpush1.msra.mxu0 0.0
    %1628 = vmatprep.subr.mxu0 0.0
    %1629 = vmatpush1.msra.mxu0 0.0
    %1630 = vmatprep.subr.mxu0 0.0
    %1631 = vmatpush1.msra.mxu0 0.0
    %1632 = vmatprep.subr.mxu0 0.0
    %1633 = vmatpush1.msra.mxu0 0.0
    %1634 = vmatprep.mubr.f32.mxu0 0.0
    %1635 = vmatmul.mubr.f32.gmra.mrb[0].mxu0 %v1495
    %v1636 = vpop.f32.mrb[0].mxu0
    %v1637 = vadd.f32 0.0, %v1636
    %v1638 = vpop.f32.mrb[0].mxu0
    %v1639 = vadd.f32 0.0, %v1638
    %1640 = vdwg.mxu0
    %v1645 = vcombine.low %v1566, %v1568
    %v1646 = vcombine.low %v1637, %v1639
    %v1648 = vunpack.c.l.s4 1983009808
    %v1649 = vunpack.c.0.s8 %v1648
    %v1650 = vlaneseq
    %v1651 = vshrl.u32 %v1650, 7
    %v1652 = vsub.s32 %v1649, %v1651
    %v1653 = vrot.slane %v1645, %v1652
    %v1655 = vunpack.c.l.s4 1983009808
    %v1656 = vunpack.c.0.s8 %v1655
    %v1657 = vlaneseq
    %v1658 = vshrl.u32 %v1657, 7
    %v1659 = vsub.s32 %v1656, %v1658
    %v1660 = vrot.slane %v1646, %v1659
    %v1661 = vcombine.low %v1653, %v1660
    %v1663 = vadd.f32 %v1498, %v1661
    %v1664 = vxor.u32 %v1663, 2147483648
    %v1665 = vmul.f32 %v1664, 1.442695
    %v1666 = vpow.pop %v1665
    %v1667 = vadd.f32 %v1666, 1.0
    %v1668 = vrcp.pop %v1667
    %v1669 = vmul.f32 1.0, %v1668
    %v1671 = vrot.slane %v1663, 2
    %v1673 = vxor.u32 %v1671, 2147483648
    %v1674 = vmul.f32 %v1673, 1.442695
    %v1675 = vpow.pop %v1674
    %v1676 = vadd.f32 %v1675, 1.0
    %v1677 = vrcp.pop %v1676
    %v1678 = vmul.f32 1.0, %v1677
    %v1679 = vrot.slane %v1663, 4
    %v1681 = vtanh.pop %v1679
    %v1682 = vrot.slane %v1663, 6
    %v1684 = vxor.u32 %v1682, 2147483648
    %v1685 = vmul.f32 %v1684, 1.442695
    %v1686 = vpow.pop %v1685
    %v1687 = vadd.f32 %v1686, 1.0
    %v1688 = vrcp.pop %v1687
    %v1689 = vmul.f32 1.0, %v1688
    %v1690 = vmul.f32 %v1678, %v1493
    %v1691 = vmul.f32 %v1669, %v1681
    %v1692 = vadd.f32 %v1690, %v1691
    %v1693 = vtanh.pop %v1692
    %v1694 = vmul.f32 %v1689, %v1693
    %1695 = vst [vmem:[#allocation2] sm:$0x3] %v1694
    %1696 = vst [vmem:[#allocation3] sm:$0x3] %v1692
    // Predicated region
    $region26: #{optimized_lstm_forward.1} parent=1 // pred_check
      %p1697 = pneg %p32
    $region27: #{optimized_lstm_forward.1} parent=1 // pred_check_branch
      %1699 = sbr.rel (%p1697) target = $region29
    $region28: #{optimized_lstm_forward.1} parent=1 // pred_region
      %v1700 = vld [vmem:[#allocation4] sm:$0xff]
      %v1701 = vld [vmem:[#allocation4 + $0x8] sm:$0xff]
      %v1702 = vld [vmem:[#allocation4 + $0x10] sm:$0xff]
      %v1703 = vld [vmem:[#allocation4 + $0x18] sm:$0xff]
      %v1704 = vld [vmem:[#allocation4 + $0x20] sm:$0xff]
      %v1705 = vld [vmem:[#allocation4 + $0x28] sm:$0xff]
      %v1706 = vld [vmem:[#allocation4 + $0x30] sm:$0xff]
      %v1707 = vld [vmem:[#allocation4 + $0x38] sm:$0xff]
      %v1708 = vld [vmem:[#allocation4 + $0x40] sm:$0xff]
      %v1709 = vld [vmem:[#allocation4 + $0x48] sm:$0xff]
      %v1710 = vld [vmem:[#allocation4 + $0x50] sm:$0xff]
      %v1711 = vld [vmem:[#allocation4 + $0x58] sm:$0xff]
      %v1712 = vld [vmem:[#allocation4 + $0x60] sm:$0xff]
      %v1713 = vld [vmem:[#allocation4 + $0x68] sm:$0xff]
      %v1714 = vld [vmem:[#allocation4 + $0x70] sm:$0xff]
      %v1715 = vld [vmem:[#allocation4 + $0x78] sm:$0xff]
      %v1716 = vld [vmem:[%s3] sm:$0x1]
      %v1718 = vlaneseq
      %v1719 = vshrl.u32 %v1718, 7
      %v1720 = vsub.s32 0, %v1719
      %v1721 = vrot.slane %v1716, %v1720
      %1723 = vmatprep.subr.mxu0 0.0
      %1724 = vmatpush1.msra.mxu0 %v1700
      %1725 = vmatprep.subr.mxu0 0.0
      %1726 = vmatpush1.msra.mxu0 %v1701
      %1727 = vmatprep.subr.mxu0 0.0
      %1728 = vmatpush1.msra.mxu0 %v1702
      %1729 = vmatprep.subr.mxu0 0.0
      %1730 = vmatpush1.msra.mxu0 %v1703
      %1731 = vmatprep.subr.mxu0 0.0
      %1732 = vmatpush1.msra.mxu0 %v1704
      %1733 = vmatprep.subr.mxu0 0.0
      %1734 = vmatpush1.msra.mxu0 %v1705
      %1735 = vmatprep.subr.mxu0 0.0
      %1736 = vmatpush1.msra.mxu0 %v1706
      %1737 = vmatprep.subr.mxu0 0.0
      %1738 = vmatpush1.msra.mxu0 %v1707
      %1739 = vmatprep.subr.mxu0 0.0
      %1740 = vmatpush1.msra.mxu0 %v1708
      %1741 = vmatprep.subr.mxu0 0.0
      %1742 = vmatpush1.msra.mxu0 %v1709
      %1743 = vmatprep.subr.mxu0 0.0
      %1744 = vmatpush1.msra.mxu0 %v1710
      %1745 = vmatprep.subr.mxu0 0.0
      %1746 = vmatpush1.msra.mxu0 %v1711
      %1747 = vmatprep.subr.mxu0 0.0
      %1748 = vmatpush1.msra.mxu0 %v1712
      %1749 = vmatprep.subr.mxu0 0.0
      %1750 = vmatpush1.msra.mxu0 %v1713
      %1751 = vmatprep.subr.mxu0 0.0
      %1752 = vmatpush1.msra.mxu0 %v1714
      %1753 = vmatprep.subr.mxu0 0.0
      %1754 = vmatpush1.msra.mxu0 %v1715
      %1755 = vmatprep.subr.mxu0 0.0
      %1756 = vmatpush1.msra.mxu0 0.0
      %1757 = vmatprep.subr.mxu0 0.0
      %1758 = vmatpush1.msra.mxu0 0.0
      %1759 = vmatprep.subr.mxu0 0.0
      %1760 = vmatpush1.msra.mxu0 0.0
      %1761 = vmatprep.subr.mxu0 0.0
      %1762 = vmatpush1.msra.mxu0 0.0
      %1763 = vmatprep.subr.mxu0 0.0
      %1764 = vmatpush1.msra.mxu0 0.0
      %1765 = vmatprep.subr.mxu0 0.0
      %1766 = vmatpush1.msra.mxu0 0.0
      %1767 = vmatprep.subr.mxu0 0.0
      %1768 = vmatpush1.msra.mxu0 0.0
      %1769 = vmatprep.subr.mxu0 0.0
      %1770 = vmatpush1.msra.mxu0 0.0
      %1771 = vmatprep.subr.mxu0 0.0
      %1772 = vmatpush1.msra.mxu0 0.0
      %1773 = vmatprep.subr.mxu0 0.0
      %1774 = vmatpush1.msra.mxu0 0.0
      %1775 = vmatprep.subr.mxu0 0.0
      %1776 = vmatpush1.msra.mxu0 0.0
      %1777 = vmatprep.subr.mxu0 0.0
      %1778 = vmatpush1.msra.mxu0 0.0
      %1779 = vmatprep.subr.mxu0 0.0
      %1780 = vmatpush1.msra.mxu0 0.0
      %1781 = vmatprep.subr.mxu0 0.0
      %1782 = vmatpush1.msra.mxu0 0.0
      %1783 = vmatprep.subr.mxu0 0.0
      %1784 = vmatpush1.msra.mxu0 0.0
      %1785 = vmatprep.subr.mxu0 0.0
      %1786 = vmatpush1.msra.mxu0 0.0
      %1787 = vmatprep.mubr.f32.mxu0 0.0
      %1788 = vmatmul.mubr.f32.gmra.mrb[0].mxu0 %v1694
      %v1789 = vpop.f32.mrb[0].mxu0
      %v1790 = vadd.f32 %v1721, %v1789
      %v1791 = vpop.f32.mrb[0].mxu0
      %1792 = vdwg.mxu0
      %1793 = vst [vmem:[#allocation7] sm:$0x3] %v1790
    $region29: #{optimized_lstm_forward.1} parent=1 // pred_fallthru
      _
    // Predicated region
    $region30: #{optimized_lstm_forward.1} parent=1 // pred_check
      _
    $region31: #{optimized_lstm_forward.1} parent=1 // pred_check_branch
      %1795 = sbr.rel (0) target = $region33
    $region32: #{optimized_lstm_forward.1} parent=1 // pred_region
      %s1797 = ssub.s32 32, 32
      %1798 = vsyncadd [#allocation6], %s1797
      %s1800 = sshll.u32 [#allocation7], 4
      %s1801 = int_to_ptr.vmem [resolvable:$true] %s1800
      %1803 = dma.vmem_to_hbm [thread:$0]  %s1801, 32, %s4, [#allocation6]
    $region33: #{optimized_lstm_forward.1} parent=1 // pred_fallthru
      _
    // Predicated region
    $region34: #{optimized_lstm_forward.1} parent=1 // pred_check
      _
    $region35: #{optimized_lstm_forward.1} parent=1 // pred_check_branch
      %1805 = sbr.rel (0) target = $region37
    $region36: #{optimized_lstm_forward.1} parent=1 // pred_region
      %1806 = dma.done [#allocation6], 32
    $region37: #{optimized_lstm_forward.1} parent=1 // pred_fallthru
      _
    %1807 = vsyncpa [#allocation5], 1
    %1808 = vsyncpa [#allocation6], 1

</llo_original>
